<compile_context>
chip_gen: v6e
topology: v6e:2x2x1
jax: 0.10.0
libtpu: 0.0.40
codegen_flags: <defaults>
</compile_context>

<pallas_src>
import functools

import jax
import jax.numpy as jnp
from jax import lax
from jax.experimental import pallas as pl
from jax.experimental.pallas import tpu as pltpu

STOP_ID = 0  # synthetic "terminate" action id (state.is_terminated analogue)


def _greedy_decode_kernel(h0_ref, w_cat_ref, b_out_ref, emb_ref,
                          preds_ref, h_out_ref, *, maxsteps, vocab):
    Bt, H = h_out_ref.shape
    V = vocab
    P = preds_ref.shape[1]  # lane-padded prediction slab width (>= maxsteps)

    # --- loop-invariant values, loaded once (weights already bf16) ------------
    w_cat = w_cat_ref[...]                     # (H, V+H) bf16: [W_out | W_upd]
    emb = emb_ref[...]                         # (V, H)   bf16
    b_out = b_out_ref[...]                     # (1, V)   f32
    col_iota = lax.broadcasted_iota(jnp.int32, (Bt, V), 1)
    lane_iota = lax.broadcasted_iota(jnp.int32, (Bt, P), 1)

    # --- init (state.start_decoding analogue); all state lives in the carry ---
    h0 = h0_ref[...]                                       # (Bt, H) f32
    term0 = jnp.zeros((Bt, 1), jnp.float32)                # 1.0 == terminated
    preds0 = jnp.full((Bt, P), STOP_ID, jnp.int32)         # one vreg at P=128

    def step_fn(step, carry):
        h, term, preds = carry
        h_bf = h.astype(jnp.bfloat16)

        # Fused TransitionModel scoring + hidden-update matmul: one 256-wide
        # MXU pass (bf16 operands, f32 accumulate), then vreg-aligned slices.
        fused = jnp.dot(h_bf, w_cat,
                        preferred_element_type=jnp.float32)   # (Bt, V+H)
        logits = fused[:, :V] + b_out                          # (Bt, V)
        upd = fused[:, V:]                                     # (Bt, H)

        # probs.max(-1): greedy pick with first-max tie-breaking (== torch.max).
        # (max + min-over-iota instead of jnp.argmax for portable Mosaic lowering.)
        mx = jnp.max(logits, axis=-1, keepdims=True)           # (Bt, 1)
        pred = jnp.min(jnp.where(logits == mx, col_iota, V),
                       axis=-1, keepdims=True)
        pred = jnp.where(term > 0.5, STOP_ID, pred).astype(jnp.int32)

        # Lane-dense select into the carried (vreg-resident) prediction slab.
        preds = jnp.where(lane_iota == step, pred, preds)

        # state.apply_action: one-hot action-embedding lookup (exact in bf16,
        # f32 accumulate) + recurrent hidden update; terminated states freeze.
        onehot = (col_iota == pred).astype(jnp.bfloat16)       # (Bt, V)
        act_emb = jnp.dot(onehot, emb,
                          preferred_element_type=jnp.float32)  # (Bt, H)
        h_new = jnp.tanh(upd + act_emb)
        h = jnp.where(term > 0.5, h, h_new)

        # predicting STOP_ID terminates a state (kept in f32 for v5e VPU).
        term = jnp.maximum(term, (pred == STOP_ID).astype(term.dtype))
        return h, term, preds

    # Whole decode loop with register-resident carry; outputs written once.
    # Full unroll for short decodes, capped unroll for long ones (serial
    # recurrence -> nothing to pipeline, keep code size / live ranges bounded).
    # TODO(synk): runtime "all terminated" early exit (the while-loop of the
    # original) needs a vector->scalar reduction gating the step; omitted for
    # lowering portability -- frozen states keep emitting STOP_ID, so outputs
    # are identical, the tail steps are just not skipped.
    unroll = True if maxsteps <= 32 else 8
    h_f, _term_f, preds_f = lax.fori_loop(0, maxsteps, step_fn,
                                          (h0, term0, preds0), unroll=unroll)
    preds_ref[...] = preds_f
    h_out_ref[...] = h_f


def _pick_batch_block(B):
    # One batch block per grid step: >= 8 rows (sublane constraint), <= 128
    # (one MXU pass of LHS rows); otherwise fall back to the full batch.
    for bt in (128, 64, 32, 16, 8):
        if B % bt == 0:
            return bt
    return B


@functools.partial(jax.jit, static_argnames=("maxsteps",))
def greedy_decode(h0, w_out, b_out, w_upd, emb, *, maxsteps=25):
    B, H = h0.shape
    V = w_out.shape[1]
    assert H % 128 == 0 and V % 128 == 0, "toy kernel assumes 128-aligned H/V"
    # TODO(synk): for vocabularies V >> VMEM, tile V (emit_pipeline) with an
    # online running-max argmax and a DMA row-gather instead of one-hot matmul.

    # Pack weights once in the wrapper: fused bf16 [W_out | W_upd] operand and
    # bf16 embedding table (halves weight VMEM/DMA vs f32 + in-kernel copies).
    w_cat_bf = jnp.concatenate([w_out, w_upd], axis=1).astype(jnp.bfloat16)
    emb_bf = emb.astype(jnp.bfloat16)
    b_out = b_out.astype(jnp.float32).reshape(1, V)

    # Lane-padded prediction slab so the output path stays on unmasked vregs.
    P = max(128, pl.cdiv(maxsteps, 128) * 128)
    bt = _pick_batch_block(B)
    grid = (B // bt,)

    kernel = functools.partial(_greedy_decode_kernel, maxsteps=maxsteps, vocab=V)
    preds_pad, h_final = pl.pallas_call(
        kernel,
        out_shape=(jax.ShapeDtypeStruct((B, P), jnp.int32),
                   jax.ShapeDtypeStruct((B, H), jnp.float32)),
        grid=grid,
        in_specs=[
            pl.BlockSpec((bt, H), lambda b: (b, 0)),        # h0 (per batch block)
            pl.BlockSpec((H, V + H), lambda b: (0, 0)),     # fused bf16 weights
            pl.BlockSpec((1, V), lambda b: (0, 0)),         # output bias
            pl.BlockSpec((V, H), lambda b: (0, 0)),         # bf16 action embeddings
        ],
        out_specs=(
            pl.BlockSpec((bt, P), lambda b: (b, 0)),        # padded pred ids
            pl.BlockSpec((bt, H), lambda b: (b, 0)),        # final hidden
        ),
        compiler_params=pltpu.CompilerParams(
            dimension_semantics=("parallel",)),             # 2 TCs on v7x
    )(h0, w_cat_bf, b_out, emb_bf)
    return preds_pad[:, :maxsteps], h_final


def greedy_action_seq_decoder(h0, params, *, maxsteps=25, gold_rules=None):
    """Forward-pass analogue of GreedyActionSeqDecoder.forward."""
    preds, h_final = greedy_decode(h0, params["w_out"], params["b_out"],
                                   params["w_upd"], params["emb"],
                                   maxsteps=maxsteps)
    out = {"output": {"pred_rule_ids": preds, "hidden": h_final}}
    if gold_rules is not None:  # hasgold branch
        seq_acc = jnp.mean(jnp.all(preds == gold_rules, axis=-1)
                           .astype(jnp.float32))
        out["seq_acc"] = seq_acc
        # TODO(synk): tree_acc (out_tree.eq(gold_tree)) needs a tree structure;
        # no clean Pallas/array equivalent for the abstract FuncTree objects.
    return out


def _reference_decode(h0, w_out, b_out, w_upd, emb, maxsteps):
    """Pure-JAX reference mirroring the kernel's bf16-operand / f32-accumulate
    matmul numerics (the fused (H, V+H) matmul is element-wise identical to
    the two separate dots, since each output element accumulates in f32)."""
    bf16 = jnp.bfloat16
    w_out_b = w_out.astype(bf16)
    w_upd_b = w_upd.astype(bf16)
    emb_b = emb.astype(bf16)
    h = h0
    B = h0.shape[0]
    term = jnp.zeros((B,), bool)
    preds = []
    for _ in range(maxsteps):
        logits = jnp.dot(h.astype(bf16), w_out_b,
                         preferred_element_type=jnp.float32) + b_out
        p = jnp.argmax(logits, axis=-1).astype(jnp.int32)
        p = jnp.where(term, STOP_ID, p)
        preds.append(p)
        act = emb_b[p].astype(jnp.float32)
        h_new = jnp.tanh(jnp.dot(h.astype(bf16), w_upd_b,
                                 preferred_element_type=jnp.float32) + act)
        h = jnp.where(term[:, None], h, h_new)
        term = term | (p == STOP_ID)
    return jnp.stack(preds, axis=1), h


if __name__ == "__main__":
    B, H, V, MAXSTEPS = 8, 128, 128, 8

    key = jax.random.PRNGKey(0)
    k0, k1, k2, k3, k4 = jax.random.split(key, 5)
    h0 = jax.random.normal(k0, (B, H), jnp.float32)
    params = {
        "w_out": jax.random.normal(k1, (H, V), jnp.float32) / jnp.sqrt(H),
        "b_out": jax.random.normal(k2, (1, V), jnp.float32) * 0.1,
        "w_upd": jax.random.normal(k3, (H, H), jnp.float32) / jnp.sqrt(H),
        "emb": jax.random.normal(k4, (V, H), jnp.float32),
    }

    # no-gold path
    res = greedy_action_seq_decoder(h0, params, maxsteps=MAXSTEPS)
    preds = jax.block_until_ready(res["output"]["pred_rule_ids"])
    h_final = jax.block_until_ready(res["output"]["hidden"])

    # hasgold path: evaluate sequence accuracy against the greedy output
    # itself (acts as a deterministic "gold" for the synthetic model).
    res_gold = greedy_action_seq_decoder(h0, params, maxsteps=MAXSTEPS,
                                         gold_rules=preds)
    seq_acc = float(jax.block_until_ready(res_gold["seq_acc"]))

    # correctness vs pure-JAX reference (same bf16-operand matmul numerics)
    ref_preds, ref_h = _reference_decode(h0, params["w_out"],
                                         params["b_out"][0],
                                         params["w_upd"], params["emb"],
                                         MAXSTEPS)
    assert preds.shape == (B, MAXSTEPS) and preds.dtype == jnp.int32
    assert h_final.shape == (B, H)
    assert bool(jnp.all(preds == ref_preds)), "pred ids mismatch vs reference"
    assert bool(jnp.allclose(h_final, ref_h, atol=1e-2, rtol=1e-2)), \
        "hidden state mismatch vs reference"
    assert abs(seq_acc - 1.0) < 1e-6

    print("KERNEL_OK")
</pallas_src>

<mosaic_0001>
module attributes {stable_mosaic.version = 11 : i64} {
  func.func @_greedy_decode_kernel(%arg0: i32, %arg1: memref<8x128xf32, #tpu.memory_space<vmem>>, %arg2: memref<128x256xbf16, #tpu.memory_space<vmem>>, %arg3: memref<1x128xf32, #tpu.memory_space<vmem>>, %arg4: memref<128x128xbf16, #tpu.memory_space<vmem>>, %arg5: memref<8x128xi32, #tpu.memory_space<vmem>>, %arg6: memref<8x128xf32, #tpu.memory_space<vmem>>) attributes {dimension_semantics = [#tpu.dimension_semantics<parallel>], iteration_bounds = array<i64: 1>, scalar_prefetch = 0 : i64, scratch_operands = 0 : i64, tpu.core_type = #tpu.core_type<tc>, window_params = [{transform_indices = @transform_0, window_bounds = array<i64: 8, 128>}, {pipeline_mode = #tpu.pipeline_mode<synchronous>, transform_indices = @transform_1, window_bounds = array<i64: 128, 256>}, {pipeline_mode = #tpu.pipeline_mode<synchronous>, transform_indices = @transform_2, window_bounds = array<i64: 1, 128>}, {pipeline_mode = #tpu.pipeline_mode<synchronous>, transform_indices = @transform_3, window_bounds = array<i64: 128, 128>}, {transform_indices = @transform_4, window_bounds = array<i64: 8, 128>}, {transform_indices = @transform_5, window_bounds = array<i64: 8, 128>}]} {
    %c0 = arith.constant 0 : index
    %c0_0 = arith.constant 0 : index
    %0 = vector.load %arg2[%c0, %c0_0] : memref<128x256xbf16, #tpu.memory_space<vmem>>, vector<128x256xbf16>
    %c0_1 = arith.constant 0 : index
    %c0_2 = arith.constant 0 : index
    %1 = vector.load %arg4[%c0_1, %c0_2] : memref<128x128xbf16, #tpu.memory_space<vmem>>, vector<128x128xbf16>
    %c0_3 = arith.constant 0 : index
    %c0_4 = arith.constant 0 : index
    %2 = vector.load %arg3[%c0_3, %c0_4] : memref<1x128xf32, #tpu.memory_space<vmem>>, vector<1x128xf32>
    %3 = tpu.iota {dimensions = array<i32: 1>} : vector<8x128xi32>
    %4 = tpu.iota {dimensions = array<i32: 1>} : vector<8x128xi32>
    %c0_5 = arith.constant 0 : index
    %c0_6 = arith.constant 0 : index
    %5 = vector.load %arg1[%c0_5, %c0_6] : memref<8x128xf32, #tpu.memory_space<vmem>>, vector<8x128xf32>
    %cst = arith.constant 0.000000e+00 : f32
    %6 = vector.broadcast %cst : f32 to vector<8x1xf32>
    %c0_i32 = arith.constant 0 : i32
    %7 = vector.broadcast %c0_i32 : i32 to vector<8x128xi32>
    %c0_i32_7 = arith.constant 0 : i32
    %8 = arith.truncf %5 : vector<8x128xf32> to vector<8x128xbf16>
    %cst_8 = arith.constant dense<0.000000e+00> : vector<8x256xf32>
    %9 = tpu.matmul %8, %0, %cst_8 {dimension_numbers = #tpu.dot_dimension_numbers<[1], [0], [0], [1], [0, 0, 1, 1], [], []>} : vector<8x128xbf16>, vector<128x256xbf16>, vector<8x256xf32> -> vector<8x256xf32>
    %10 = vector.extract_strided_slice %9 {offsets = [0, 0], sizes = [8, 128], strides = [1, 1]} : vector<8x256xf32> to vector<8x128xf32>
    %11 = vector.broadcast %2 : vector<1x128xf32> to vector<8x128xf32>
    %12 = arith.addf %10, %11 : vector<8x128xf32>
    %13 = vector.extract_strided_slice %9 {offsets = [0, 128], sizes = [8, 128], strides = [1, 1]} : vector<8x256xf32> to vector<8x128xf32>
    %cst_9 = arith.constant dense<0xFF800000> : vector<8xf32>
    %14 = vector.multi_reduction <maximumf>, %12, %cst_9 [1] : vector<8x128xf32> to vector<8xf32>
    %15 = vector.shape_cast %14 : vector<8xf32> to vector<8x1xf32>
    %16 = vector.broadcast %15 : vector<8x1xf32> to vector<8x128xf32>
    %17 = arith.cmpf oeq, %12, %16 : vector<8x128xf32>
    %c128_i32 = arith.constant 128 : i32
    %18 = vector.broadcast %c128_i32 : i32 to vector<8x128xi32>
    %19 = arith.select %17, %3, %18 : vector<8x128xi1>, vector<8x128xi32>
    %cst_10 = arith.constant dense<2147483647> : vector<8xi32>
    %20 = vector.multi_reduction <minsi>, %19, %cst_10 [1] : vector<8x128xi32> to vector<8xi32>
    %21 = vector.shape_cast %20 : vector<8xi32> to vector<8x1xi32>
    %cst_11 = arith.constant 5.000000e-01 : f32
    %22 = vector.broadcast %cst_11 : f32 to vector<8x1xf32>
    %23 = arith.cmpf ogt, %6, %22 : vector<8x1xf32>
    %c0_i32_12 = arith.constant 0 : i32
    %24 = vector.broadcast %c0_i32_12 : i32 to vector<8x1xi32>
    %25 = arith.select %23, %24, %21 : vector<8x1xi1>, vector<8x1xi32>
    %26 = vector.broadcast %c0_i32_7 : i32 to vector<8x128xi32>
    %27 = arith.cmpi eq, %4, %26 : vector<8x128xi32>
    %28 = vector.shape_cast %25 : vector<8x1xi32> to vector<8x1xi32>
    %29 = vector.broadcast %28 : vector<8x1xi32> to vector<8x128xi32>
    %30 = arith.select %27, %29, %7 : vector<8x128xi1>, vector<8x128xi32>
    %31 = vector.broadcast %25 : vector<8x1xi32> to vector<8x128xi32>
    %32 = arith.cmpi eq, %3, %31 : vector<8x128xi32>
    %33 = arith.extui %32 : vector<8x128xi1> to vector<8x128xi32>
    %34 = arith.sitofp %33 : vector<8x128xi32> to vector<8x128xf32>
    %35 = arith.truncf %34 : vector<8x128xf32> to vector<8x128xbf16>
    %cst_13 = arith.constant dense<0.000000e+00> : vector<8x128xf32>
    %36 = tpu.matmul %35, %1, %cst_13 {dimension_numbers = #tpu.dot_dimension_numbers<[1], [0], [0], [1], [0, 0, 1, 1], [], []>} : vector<8x128xbf16>, vector<128x128xbf16>, vector<8x128xf32> -> vector<8x128xf32>
    %37 = arith.addf %13, %36 : vector<8x128xf32>
    %38 = math.tanh %37 : vector<8x128xf32>
    %cst_14 = arith.constant 5.000000e-01 : f32
    %39 = vector.broadcast %cst_14 : f32 to vector<8x1xf32>
    %40 = arith.cmpf ogt, %6, %39 : vector<8x1xf32>
    %41 = vector.shape_cast %40 : vector<8x1xi1> to vector<8x1xi1>
    %42 = vector.broadcast %41 : vector<8x1xi1> to vector<8x128xi1>
    %43 = arith.select %42, %5, %38 : vector<8x128xi1>, vector<8x128xf32>
    %c0_i32_15 = arith.constant 0 : i32
    %44 = vector.broadcast %c0_i32_15 : i32 to vector<8x1xi32>
    %45 = arith.cmpi eq, %25, %44 : vector<8x1xi32>
    %46 = arith.extui %45 : vector<8x1xi1> to vector<8x1xi32>
    %47 = arith.sitofp %46 : vector<8x1xi32> to vector<8x1xf32>
    %48 = arith.maximumf %6, %47 : vector<8x1xf32>
    %c1_i32 = arith.constant 1 : i32
    %49 = arith.truncf %43 : vector<8x128xf32> to vector<8x128xbf16>
    %cst_16 = arith.constant dense<0.000000e+00> : vector<8x256xf32>
    %50 = tpu.matmul %49, %0, %cst_16 {dimension_numbers = #tpu.dot_dimension_numbers<[1], [0], [0], [1], [0, 0, 1, 1], [], []>} : vector<8x128xbf16>, vector<128x256xbf16>, vector<8x256xf32> -> vector<8x256xf32>
    %51 = vector.extract_strided_slice %50 {offsets = [0, 0], sizes = [8, 128], strides = [1, 1]} : vector<8x256xf32> to vector<8x128xf32>
    %52 = vector.broadcast %2 : vector<1x128xf32> to vector<8x128xf32>
    %53 = arith.addf %51, %52 : vector<8x128xf32>
    %54 = vector.extract_strided_slice %50 {offsets = [0, 128], sizes = [8, 128], strides = [1, 1]} : vector<8x256xf32> to vector<8x128xf32>
    %cst_17 = arith.constant dense<0xFF800000> : vector<8xf32>
    %55 = vector.multi_reduction <maximumf>, %53, %cst_17 [1] : vector<8x128xf32> to vector<8xf32>
    %56 = vector.shape_cast %55 : vector<8xf32> to vector<8x1xf32>
    %57 = vector.broadcast %56 : vector<8x1xf32> to vector<8x128xf32>
    %58 = arith.cmpf oeq, %53, %57 : vector<8x128xf32>
    %c128_i32_18 = arith.constant 128 : i32
    %59 = vector.broadcast %c128_i32_18 : i32 to vector<8x128xi32>
    %60 = arith.select %58, %3, %59 : vector<8x128xi1>, vector<8x128xi32>
    %cst_19 = arith.constant dense<2147483647> : vector<8xi32>
    %61 = vector.multi_reduction <minsi>, %60, %cst_19 [1] : vector<8x128xi32> to vector<8xi32>
    %62 = vector.shape_cast %61 : vector<8xi32> to vector<8x1xi32>
    %cst_20 = arith.constant 5.000000e-01 : f32
    %63 = vector.broadcast %cst_20 : f32 to vector<8x1xf32>
    %64 = arith.cmpf ogt, %48, %63 : vector<8x1xf32>
    %c0_i32_21 = arith.constant 0 : i32
    %65 = vector.broadcast %c0_i32_21 : i32 to vector<8x1xi32>
    %66 = arith.select %64, %65, %62 : vector<8x1xi1>, vector<8x1xi32>
    %67 = vector.broadcast %c1_i32 : i32 to vector<8x128xi32>
    %68 = arith.cmpi eq, %4, %67 : vector<8x128xi32>
    %69 = vector.shape_cast %66 : vector<8x1xi32> to vector<8x1xi32>
    %70 = vector.broadcast %69 : vector<8x1xi32> to vector<8x128xi32>
    %71 = arith.select %68, %70, %30 : vector<8x128xi1>, vector<8x128xi32>
    %72 = vector.broadcast %66 : vector<8x1xi32> to vector<8x128xi32>
    %73 = arith.cmpi eq, %3, %72 : vector<8x128xi32>
    %74 = arith.extui %73 : vector<8x128xi1> to vector<8x128xi32>
    %75 = arith.sitofp %74 : vector<8x128xi32> to vector<8x128xf32>
    %76 = arith.truncf %75 : vector<8x128xf32> to vector<8x128xbf16>
    %cst_22 = arith.constant dense<0.000000e+00> : vector<8x128xf32>
    %77 = tpu.matmul %76, %1, %cst_22 {dimension_numbers = #tpu.dot_dimension_numbers<[1], [0], [0], [1], [0, 0, 1, 1], [], []>} : vector<8x128xbf16>, vector<128x128xbf16>, vector<8x128xf32> -> vector<8x128xf32>
    %78 = arith.addf %54, %77 : vector<8x128xf32>
    %79 = math.tanh %78 : vector<8x128xf32>
    %cst_23 = arith.constant 5.000000e-01 : f32
    %80 = vector.broadcast %cst_23 : f32 to vector<8x1xf32>
    %81 = arith.cmpf ogt, %48, %80 : vector<8x1xf32>
    %82 = vector.shape_cast %81 : vector<8x1xi1> to vector<8x1xi1>
    %83 = vector.broadcast %82 : vector<8x1xi1> to vector<8x128xi1>
    %84 = arith.select %83, %43, %79 : vector<8x128xi1>, vector<8x128xf32>
    %c0_i32_24 = arith.constant 0 : i32
    %85 = vector.broadcast %c0_i32_24 : i32 to vector<8x1xi32>
    %86 = arith.cmpi eq, %66, %85 : vector<8x1xi32>
    %87 = arith.extui %86 : vector<8x1xi1> to vector<8x1xi32>
    %88 = arith.sitofp %87 : vector<8x1xi32> to vector<8x1xf32>
    %89 = arith.maximumf %48, %88 : vector<8x1xf32>
    %c2_i32 = arith.constant 2 : i32
    %90 = arith.truncf %84 : vector<8x128xf32> to vector<8x128xbf16>
    %cst_25 = arith.constant dense<0.000000e+00> : vector<8x256xf32>
    %91 = tpu.matmul %90, %0, %cst_25 {dimension_numbers = #tpu.dot_dimension_numbers<[1], [0], [0], [1], [0, 0, 1, 1], [], []>} : vector<8x128xbf16>, vector<128x256xbf16>, vector<8x256xf32> -> vector<8x256xf32>
    %92 = vector.extract_strided_slice %91 {offsets = [0, 0], sizes = [8, 128], strides = [1, 1]} : vector<8x256xf32> to vector<8x128xf32>
    %93 = vector.broadcast %2 : vector<1x128xf32> to vector<8x128xf32>
    %94 = arith.addf %92, %93 : vector<8x128xf32>
    %95 = vector.extract_strided_slice %91 {offsets = [0, 128], sizes = [8, 128], strides = [1, 1]} : vector<8x256xf32> to vector<8x128xf32>
    %cst_26 = arith.constant dense<0xFF800000> : vector<8xf32>
    %96 = vector.multi_reduction <maximumf>, %94, %cst_26 [1] : vector<8x128xf32> to vector<8xf32>
    %97 = vector.shape_cast %96 : vector<8xf32> to vector<8x1xf32>
    %98 = vector.broadcast %97 : vector<8x1xf32> to vector<8x128xf32>
    %99 = arith.cmpf oeq, %94, %98 : vector<8x128xf32>
    %c128_i32_27 = arith.constant 128 : i32
    %100 = vector.broadcast %c128_i32_27 : i32 to vector<8x128xi32>
    %101 = arith.select %99, %3, %100 : vector<8x128xi1>, vector<8x128xi32>
    %cst_28 = arith.constant dense<2147483647> : vector<8xi32>
    %102 = vector.multi_reduction <minsi>, %101, %cst_28 [1] : vector<8x128xi32> to vector<8xi32>
    %103 = vector.shape_cast %102 : vector<8xi32> to vector<8x1xi32>
    %cst_29 = arith.constant 5.000000e-01 : f32
    %104 = vector.broadcast %cst_29 : f32 to vector<8x1xf32>
    %105 = arith.cmpf ogt, %89, %104 : vector<8x1xf32>
    %c0_i32_30 = arith.constant 0 : i32
    %106 = vector.broadcast %c0_i32_30 : i32 to vector<8x1xi32>
    %107 = arith.select %105, %106, %103 : vector<8x1xi1>, vector<8x1xi32>
    %108 = vector.broadcast %c2_i32 : i32 to vector<8x128xi32>
    %109 = arith.cmpi eq, %4, %108 : vector<8x128xi32>
    %110 = vector.shape_cast %107 : vector<8x1xi32> to vector<8x1xi32>
    %111 = vector.broadcast %110 : vector<8x1xi32> to vector<8x128xi32>
    %112 = arith.select %109, %111, %71 : vector<8x128xi1>, vector<8x128xi32>
    %113 = vector.broadcast %107 : vector<8x1xi32> to vector<8x128xi32>
    %114 = arith.cmpi eq, %3, %113 : vector<8x128xi32>
    %115 = arith.extui %114 : vector<8x128xi1> to vector<8x128xi32>
    %116 = arith.sitofp %115 : vector<8x128xi32> to vector<8x128xf32>
    %117 = arith.truncf %116 : vector<8x128xf32> to vector<8x128xbf16>
    %cst_31 = arith.constant dense<0.000000e+00> : vector<8x128xf32>
    %118 = tpu.matmul %117, %1, %cst_31 {dimension_numbers = #tpu.dot_dimension_numbers<[1], [0], [0], [1], [0, 0, 1, 1], [], []>} : vector<8x128xbf16>, vector<128x128xbf16>, vector<8x128xf32> -> vector<8x128xf32>
    %119 = arith.addf %95, %118 : vector<8x128xf32>
    %120 = math.tanh %119 : vector<8x128xf32>
    %cst_32 = arith.constant 5.000000e-01 : f32
    %121 = vector.broadcast %cst_32 : f32 to vector<8x1xf32>
    %122 = arith.cmpf ogt, %89, %121 : vector<8x1xf32>
    %123 = vector.shape_cast %122 : vector<8x1xi1> to vector<8x1xi1>
    %124 = vector.broadcast %123 : vector<8x1xi1> to vector<8x128xi1>
    %125 = arith.select %124, %84, %120 : vector<8x128xi1>, vector<8x128xf32>
    %c0_i32_33 = arith.constant 0 : i32
    %126 = vector.broadcast %c0_i32_33 : i32 to vector<8x1xi32>
    %127 = arith.cmpi eq, %107, %126 : vector<8x1xi32>
    %128 = arith.extui %127 : vector<8x1xi1> to vector<8x1xi32>
    %129 = arith.sitofp %128 : vector<8x1xi32> to vector<8x1xf32>
    %130 = arith.maximumf %89, %129 : vector<8x1xf32>
    %c3_i32 = arith.constant 3 : i32
    %131 = arith.truncf %125 : vector<8x128xf32> to vector<8x128xbf16>
    %cst_34 = arith.constant dense<0.000000e+00> : vector<8x256xf32>
    %132 = tpu.matmul %131, %0, %cst_34 {dimension_numbers = #tpu.dot_dimension_numbers<[1], [0], [0], [1], [0, 0, 1, 1], [], []>} : vector<8x128xbf16>, vector<128x256xbf16>, vector<8x256xf32> -> vector<8x256xf32>
    %133 = vector.extract_strided_slice %132 {offsets = [0, 0], sizes = [8, 128], strides = [1, 1]} : vector<8x256xf32> to vector<8x128xf32>
    %134 = vector.broadcast %2 : vector<1x128xf32> to vector<8x128xf32>
    %135 = arith.addf %133, %134 : vector<8x128xf32>
    %136 = vector.extract_strided_slice %132 {offsets = [0, 128], sizes = [8, 128], strides = [1, 1]} : vector<8x256xf32> to vector<8x128xf32>
    %cst_35 = arith.constant dense<0xFF800000> : vector<8xf32>
    %137 = vector.multi_reduction <maximumf>, %135, %cst_35 [1] : vector<8x128xf32> to vector<8xf32>
    %138 = vector.shape_cast %137 : vector<8xf32> to vector<8x1xf32>
    %139 = vector.broadcast %138 : vector<8x1xf32> to vector<8x128xf32>
    %140 = arith.cmpf oeq, %135, %139 : vector<8x128xf32>
    %c128_i32_36 = arith.constant 128 : i32
    %141 = vector.broadcast %c128_i32_36 : i32 to vector<8x128xi32>
    %142 = arith.select %140, %3, %141 : vector<8x128xi1>, vector<8x128xi32>
    %cst_37 = arith.constant dense<2147483647> : vector<8xi32>
    %143 = vector.multi_reduction <minsi>, %142, %cst_37 [1] : vector<8x128xi32> to vector<8xi32>
    %144 = vector.shape_cast %143 : vector<8xi32> to vector<8x1xi32>
    %cst_38 = arith.constant 5.000000e-01 : f32
    %145 = vector.broadcast %cst_38 : f32 to vector<8x1xf32>
    %146 = arith.cmpf ogt, %130, %145 : vector<8x1xf32>
    %c0_i32_39 = arith.constant 0 : i32
    %147 = vector.broadcast %c0_i32_39 : i32 to vector<8x1xi32>
    %148 = arith.select %146, %147, %144 : vector<8x1xi1>, vector<8x1xi32>
    %149 = vector.broadcast %c3_i32 : i32 to vector<8x128xi32>
    %150 = arith.cmpi eq, %4, %149 : vector<8x128xi32>
    %151 = vector.shape_cast %148 : vector<8x1xi32> to vector<8x1xi32>
    %152 = vector.broadcast %151 : vector<8x1xi32> to vector<8x128xi32>
    %153 = arith.select %150, %152, %112 : vector<8x128xi1>, vector<8x128xi32>
    %154 = vector.broadcast %148 : vector<8x1xi32> to vector<8x128xi32>
    %155 = arith.cmpi eq, %3, %154 : vector<8x128xi32>
    %156 = arith.extui %155 : vector<8x128xi1> to vector<8x128xi32>
    %157 = arith.sitofp %156 : vector<8x128xi32> to vector<8x128xf32>
    %158 = arith.truncf %157 : vector<8x128xf32> to vector<8x128xbf16>
    %cst_40 = arith.constant dense<0.000000e+00> : vector<8x128xf32>
    %159 = tpu.matmul %158, %1, %cst_40 {dimension_numbers = #tpu.dot_dimension_numbers<[1], [0], [0], [1], [0, 0, 1, 1], [], []>} : vector<8x128xbf16>, vector<128x128xbf16>, vector<8x128xf32> -> vector<8x128xf32>
    %160 = arith.addf %136, %159 : vector<8x128xf32>
    %161 = math.tanh %160 : vector<8x128xf32>
    %cst_41 = arith.constant 5.000000e-01 : f32
    %162 = vector.broadcast %cst_41 : f32 to vector<8x1xf32>
    %163 = arith.cmpf ogt, %130, %162 : vector<8x1xf32>
    %164 = vector.shape_cast %163 : vector<8x1xi1> to vector<8x1xi1>
    %165 = vector.broadcast %164 : vector<8x1xi1> to vector<8x128xi1>
    %166 = arith.select %165, %125, %161 : vector<8x128xi1>, vector<8x128xf32>
    %c0_i32_42 = arith.constant 0 : i32
    %167 = vector.broadcast %c0_i32_42 : i32 to vector<8x1xi32>
    %168 = arith.cmpi eq, %148, %167 : vector<8x1xi32>
    %169 = arith.extui %168 : vector<8x1xi1> to vector<8x1xi32>
    %170 = arith.sitofp %169 : vector<8x1xi32> to vector<8x1xf32>
    %171 = arith.maximumf %130, %170 : vector<8x1xf32>
    %c4_i32 = arith.constant 4 : i32
    %172 = arith.truncf %166 : vector<8x128xf32> to vector<8x128xbf16>
    %cst_43 = arith.constant dense<0.000000e+00> : vector<8x256xf32>
    %173 = tpu.matmul %172, %0, %cst_43 {dimension_numbers = #tpu.dot_dimension_numbers<[1], [0], [0], [1], [0, 0, 1, 1], [], []>} : vector<8x128xbf16>, vector<128x256xbf16>, vector<8x256xf32> -> vector<8x256xf32>
    %174 = vector.extract_strided_slice %173 {offsets = [0, 0], sizes = [8, 128], strides = [1, 1]} : vector<8x256xf32> to vector<8x128xf32>
    %175 = vector.broadcast %2 : vector<1x128xf32> to vector<8x128xf32>
    %176 = arith.addf %174, %175 : vector<8x128xf32>
    %177 = vector.extract_strided_slice %173 {offsets = [0, 128], sizes = [8, 128], strides = [1, 1]} : vector<8x256xf32> to vector<8x128xf32>
    %cst_44 = arith.constant dense<0xFF800000> : vector<8xf32>
    %178 = vector.multi_reduction <maximumf>, %176, %cst_44 [1] : vector<8x128xf32> to vector<8xf32>
    %179 = vector.shape_cast %178 : vector<8xf32> to vector<8x1xf32>
    %180 = vector.broadcast %179 : vector<8x1xf32> to vector<8x128xf32>
    %181 = arith.cmpf oeq, %176, %180 : vector<8x128xf32>
    %c128_i32_45 = arith.constant 128 : i32
    %182 = vector.broadcast %c128_i32_45 : i32 to vector<8x128xi32>
    %183 = arith.select %181, %3, %182 : vector<8x128xi1>, vector<8x128xi32>
    %cst_46 = arith.constant dense<2147483647> : vector<8xi32>
    %184 = vector.multi_reduction <minsi>, %183, %cst_46 [1] : vector<8x128xi32> to vector<8xi32>
    %185 = vector.shape_cast %184 : vector<8xi32> to vector<8x1xi32>
    %cst_47 = arith.constant 5.000000e-01 : f32
    %186 = vector.broadcast %cst_47 : f32 to vector<8x1xf32>
    %187 = arith.cmpf ogt, %171, %186 : vector<8x1xf32>
    %c0_i32_48 = arith.constant 0 : i32
    %188 = vector.broadcast %c0_i32_48 : i32 to vector<8x1xi32>
    %189 = arith.select %187, %188, %185 : vector<8x1xi1>, vector<8x1xi32>
    %190 = vector.broadcast %c4_i32 : i32 to vector<8x128xi32>
    %191 = arith.cmpi eq, %4, %190 : vector<8x128xi32>
    %192 = vector.shape_cast %189 : vector<8x1xi32> to vector<8x1xi32>
    %193 = vector.broadcast %192 : vector<8x1xi32> to vector<8x128xi32>
    %194 = arith.select %191, %193, %153 : vector<8x128xi1>, vector<8x128xi32>
    %195 = vector.broadcast %189 : vector<8x1xi32> to vector<8x128xi32>
    %196 = arith.cmpi eq, %3, %195 : vector<8x128xi32>
    %197 = arith.extui %196 : vector<8x128xi1> to vector<8x128xi32>
    %198 = arith.sitofp %197 : vector<8x128xi32> to vector<8x128xf32>
    %199 = arith.truncf %198 : vector<8x128xf32> to vector<8x128xbf16>
    %cst_49 = arith.constant dense<0.000000e+00> : vector<8x128xf32>
    %200 = tpu.matmul %199, %1, %cst_49 {dimension_numbers = #tpu.dot_dimension_numbers<[1], [0], [0], [1], [0, 0, 1, 1], [], []>} : vector<8x128xbf16>, vector<128x128xbf16>, vector<8x128xf32> -> vector<8x128xf32>
    %201 = arith.addf %177, %200 : vector<8x128xf32>
    %202 = math.tanh %201 : vector<8x128xf32>
    %cst_50 = arith.constant 5.000000e-01 : f32
    %203 = vector.broadcast %cst_50 : f32 to vector<8x1xf32>
    %204 = arith.cmpf ogt, %171, %203 : vector<8x1xf32>
    %205 = vector.shape_cast %204 : vector<8x1xi1> to vector<8x1xi1>
    %206 = vector.broadcast %205 : vector<8x1xi1> to vector<8x128xi1>
    %207 = arith.select %206, %166, %202 : vector<8x128xi1>, vector<8x128xf32>
    %c0_i32_51 = arith.constant 0 : i32
    %208 = vector.broadcast %c0_i32_51 : i32 to vector<8x1xi32>
    %209 = arith.cmpi eq, %189, %208 : vector<8x1xi32>
    %210 = arith.extui %209 : vector<8x1xi1> to vector<8x1xi32>
    %211 = arith.sitofp %210 : vector<8x1xi32> to vector<8x1xf32>
    %212 = arith.maximumf %171, %211 : vector<8x1xf32>
    %c5_i32 = arith.constant 5 : i32
    %213 = arith.truncf %207 : vector<8x128xf32> to vector<8x128xbf16>
    %cst_52 = arith.constant dense<0.000000e+00> : vector<8x256xf32>
    %214 = tpu.matmul %213, %0, %cst_52 {dimension_numbers = #tpu.dot_dimension_numbers<[1], [0], [0], [1], [0, 0, 1, 1], [], []>} : vector<8x128xbf16>, vector<128x256xbf16>, vector<8x256xf32> -> vector<8x256xf32>
    %215 = vector.extract_strided_slice %214 {offsets = [0, 0], sizes = [8, 128], strides = [1, 1]} : vector<8x256xf32> to vector<8x128xf32>
    %216 = vector.broadcast %2 : vector<1x128xf32> to vector<8x128xf32>
    %217 = arith.addf %215, %216 : vector<8x128xf32>
    %218 = vector.extract_strided_slice %214 {offsets = [0, 128], sizes = [8, 128], strides = [1, 1]} : vector<8x256xf32> to vector<8x128xf32>
    %cst_53 = arith.constant dense<0xFF800000> : vector<8xf32>
    %219 = vector.multi_reduction <maximumf>, %217, %cst_53 [1] : vector<8x128xf32> to vector<8xf32>
    %220 = vector.shape_cast %219 : vector<8xf32> to vector<8x1xf32>
    %221 = vector.broadcast %220 : vector<8x1xf32> to vector<8x128xf32>
    %222 = arith.cmpf oeq, %217, %221 : vector<8x128xf32>
    %c128_i32_54 = arith.constant 128 : i32
    %223 = vector.broadcast %c128_i32_54 : i32 to vector<8x128xi32>
    %224 = arith.select %222, %3, %223 : vector<8x128xi1>, vector<8x128xi32>
    %cst_55 = arith.constant dense<2147483647> : vector<8xi32>
    %225 = vector.multi_reduction <minsi>, %224, %cst_55 [1] : vector<8x128xi32> to vector<8xi32>
    %226 = vector.shape_cast %225 : vector<8xi32> to vector<8x1xi32>
    %cst_56 = arith.constant 5.000000e-01 : f32
    %227 = vector.broadcast %cst_56 : f32 to vector<8x1xf32>
    %228 = arith.cmpf ogt, %212, %227 : vector<8x1xf32>
    %c0_i32_57 = arith.constant 0 : i32
    %229 = vector.broadcast %c0_i32_57 : i32 to vector<8x1xi32>
    %230 = arith.select %228, %229, %226 : vector<8x1xi1>, vector<8x1xi32>
    %231 = vector.broadcast %c5_i32 : i32 to vector<8x128xi32>
    %232 = arith.cmpi eq, %4, %231 : vector<8x128xi32>
    %233 = vector.shape_cast %230 : vector<8x1xi32> to vector<8x1xi32>
    %234 = vector.broadcast %233 : vector<8x1xi32> to vector<8x128xi32>
    %235 = arith.select %232, %234, %194 : vector<8x128xi1>, vector<8x128xi32>
    %236 = vector.broadcast %230 : vector<8x1xi32> to vector<8x128xi32>
    %237 = arith.cmpi eq, %3, %236 : vector<8x128xi32>
    %238 = arith.extui %237 : vector<8x128xi1> to vector<8x128xi32>
    %239 = arith.sitofp %238 : vector<8x128xi32> to vector<8x128xf32>
    %240 = arith.truncf %239 : vector<8x128xf32> to vector<8x128xbf16>
    %cst_58 = arith.constant dense<0.000000e+00> : vector<8x128xf32>
    %241 = tpu.matmul %240, %1, %cst_58 {dimension_numbers = #tpu.dot_dimension_numbers<[1], [0], [0], [1], [0, 0, 1, 1], [], []>} : vector<8x128xbf16>, vector<128x128xbf16>, vector<8x128xf32> -> vector<8x128xf32>
    %242 = arith.addf %218, %241 : vector<8x128xf32>
    %243 = math.tanh %242 : vector<8x128xf32>
    %cst_59 = arith.constant 5.000000e-01 : f32
    %244 = vector.broadcast %cst_59 : f32 to vector<8x1xf32>
    %245 = arith.cmpf ogt, %212, %244 : vector<8x1xf32>
    %246 = vector.shape_cast %245 : vector<8x1xi1> to vector<8x1xi1>
    %247 = vector.broadcast %246 : vector<8x1xi1> to vector<8x128xi1>
    %248 = arith.select %247, %207, %243 : vector<8x128xi1>, vector<8x128xf32>
    %c0_i32_60 = arith.constant 0 : i32
    %249 = vector.broadcast %c0_i32_60 : i32 to vector<8x1xi32>
    %250 = arith.cmpi eq, %230, %249 : vector<8x1xi32>
    %251 = arith.extui %250 : vector<8x1xi1> to vector<8x1xi32>
    %252 = arith.sitofp %251 : vector<8x1xi32> to vector<8x1xf32>
    %253 = arith.maximumf %212, %252 : vector<8x1xf32>
    %c6_i32 = arith.constant 6 : i32
    %254 = arith.truncf %248 : vector<8x128xf32> to vector<8x128xbf16>
    %cst_61 = arith.constant dense<0.000000e+00> : vector<8x256xf32>
    %255 = tpu.matmul %254, %0, %cst_61 {dimension_numbers = #tpu.dot_dimension_numbers<[1], [0], [0], [1], [0, 0, 1, 1], [], []>} : vector<8x128xbf16>, vector<128x256xbf16>, vector<8x256xf32> -> vector<8x256xf32>
    %256 = vector.extract_strided_slice %255 {offsets = [0, 0], sizes = [8, 128], strides = [1, 1]} : vector<8x256xf32> to vector<8x128xf32>
    %257 = vector.broadcast %2 : vector<1x128xf32> to vector<8x128xf32>
    %258 = arith.addf %256, %257 : vector<8x128xf32>
    %259 = vector.extract_strided_slice %255 {offsets = [0, 128], sizes = [8, 128], strides = [1, 1]} : vector<8x256xf32> to vector<8x128xf32>
    %cst_62 = arith.constant dense<0xFF800000> : vector<8xf32>
    %260 = vector.multi_reduction <maximumf>, %258, %cst_62 [1] : vector<8x128xf32> to vector<8xf32>
    %261 = vector.shape_cast %260 : vector<8xf32> to vector<8x1xf32>
    %262 = vector.broadcast %261 : vector<8x1xf32> to vector<8x128xf32>
    %263 = arith.cmpf oeq, %258, %262 : vector<8x128xf32>
    %c128_i32_63 = arith.constant 128 : i32
    %264 = vector.broadcast %c128_i32_63 : i32 to vector<8x128xi32>
    %265 = arith.select %263, %3, %264 : vector<8x128xi1>, vector<8x128xi32>
    %cst_64 = arith.constant dense<2147483647> : vector<8xi32>
    %266 = vector.multi_reduction <minsi>, %265, %cst_64 [1] : vector<8x128xi32> to vector<8xi32>
    %267 = vector.shape_cast %266 : vector<8xi32> to vector<8x1xi32>
    %cst_65 = arith.constant 5.000000e-01 : f32
    %268 = vector.broadcast %cst_65 : f32 to vector<8x1xf32>
    %269 = arith.cmpf ogt, %253, %268 : vector<8x1xf32>
    %c0_i32_66 = arith.constant 0 : i32
    %270 = vector.broadcast %c0_i32_66 : i32 to vector<8x1xi32>
    %271 = arith.select %269, %270, %267 : vector<8x1xi1>, vector<8x1xi32>
    %272 = vector.broadcast %c6_i32 : i32 to vector<8x128xi32>
    %273 = arith.cmpi eq, %4, %272 : vector<8x128xi32>
    %274 = vector.shape_cast %271 : vector<8x1xi32> to vector<8x1xi32>
    %275 = vector.broadcast %274 : vector<8x1xi32> to vector<8x128xi32>
    %276 = arith.select %273, %275, %235 : vector<8x128xi1>, vector<8x128xi32>
    %277 = vector.broadcast %271 : vector<8x1xi32> to vector<8x128xi32>
    %278 = arith.cmpi eq, %3, %277 : vector<8x128xi32>
    %279 = arith.extui %278 : vector<8x128xi1> to vector<8x128xi32>
    %280 = arith.sitofp %279 : vector<8x128xi32> to vector<8x128xf32>
    %281 = arith.truncf %280 : vector<8x128xf32> to vector<8x128xbf16>
    %cst_67 = arith.constant dense<0.000000e+00> : vector<8x128xf32>
    %282 = tpu.matmul %281, %1, %cst_67 {dimension_numbers = #tpu.dot_dimension_numbers<[1], [0], [0], [1], [0, 0, 1, 1], [], []>} : vector<8x128xbf16>, vector<128x128xbf16>, vector<8x128xf32> -> vector<8x128xf32>
    %283 = arith.addf %259, %282 : vector<8x128xf32>
    %284 = math.tanh %283 : vector<8x128xf32>
    %cst_68 = arith.constant 5.000000e-01 : f32
    %285 = vector.broadcast %cst_68 : f32 to vector<8x1xf32>
    %286 = arith.cmpf ogt, %253, %285 : vector<8x1xf32>
    %287 = vector.shape_cast %286 : vector<8x1xi1> to vector<8x1xi1>
    %288 = vector.broadcast %287 : vector<8x1xi1> to vector<8x128xi1>
    %289 = arith.select %288, %248, %284 : vector<8x128xi1>, vector<8x128xf32>
    %c0_i32_69 = arith.constant 0 : i32
    %290 = vector.broadcast %c0_i32_69 : i32 to vector<8x1xi32>
    %291 = arith.cmpi eq, %271, %290 : vector<8x1xi32>
    %292 = arith.extui %291 : vector<8x1xi1> to vector<8x1xi32>
    %293 = arith.sitofp %292 : vector<8x1xi32> to vector<8x1xf32>
    %294 = arith.maximumf %253, %293 : vector<8x1xf32>
    %c7_i32 = arith.constant 7 : i32
    %295 = arith.truncf %289 : vector<8x128xf32> to vector<8x128xbf16>
    %cst_70 = arith.constant dense<0.000000e+00> : vector<8x256xf32>
    %296 = tpu.matmul %295, %0, %cst_70 {dimension_numbers = #tpu.dot_dimension_numbers<[1], [0], [0], [1], [0, 0, 1, 1], [], []>} : vector<8x128xbf16>, vector<128x256xbf16>, vector<8x256xf32> -> vector<8x256xf32>
    %297 = vector.extract_strided_slice %296 {offsets = [0, 0], sizes = [8, 128], strides = [1, 1]} : vector<8x256xf32> to vector<8x128xf32>
    %298 = vector.broadcast %2 : vector<1x128xf32> to vector<8x128xf32>
    %299 = arith.addf %297, %298 : vector<8x128xf32>
    %300 = vector.extract_strided_slice %296 {offsets = [0, 128], sizes = [8, 128], strides = [1, 1]} : vector<8x256xf32> to vector<8x128xf32>
    %cst_71 = arith.constant dense<0xFF800000> : vector<8xf32>
    %301 = vector.multi_reduction <maximumf>, %299, %cst_71 [1] : vector<8x128xf32> to vector<8xf32>
    %302 = vector.shape_cast %301 : vector<8xf32> to vector<8x1xf32>
    %303 = vector.broadcast %302 : vector<8x1xf32> to vector<8x128xf32>
    %304 = arith.cmpf oeq, %299, %303 : vector<8x128xf32>
    %c128_i32_72 = arith.constant 128 : i32
    %305 = vector.broadcast %c128_i32_72 : i32 to vector<8x128xi32>
    %306 = arith.select %304, %3, %305 : vector<8x128xi1>, vector<8x128xi32>
    %cst_73 = arith.constant dense<2147483647> : vector<8xi32>
    %307 = vector.multi_reduction <minsi>, %306, %cst_73 [1] : vector<8x128xi32> to vector<8xi32>
    %308 = vector.shape_cast %307 : vector<8xi32> to vector<8x1xi32>
    %cst_74 = arith.constant 5.000000e-01 : f32
    %309 = vector.broadcast %cst_74 : f32 to vector<8x1xf32>
    %310 = arith.cmpf ogt, %294, %309 : vector<8x1xf32>
    %c0_i32_75 = arith.constant 0 : i32
    %311 = vector.broadcast %c0_i32_75 : i32 to vector<8x1xi32>
    %312 = arith.select %310, %311, %308 : vector<8x1xi1>, vector<8x1xi32>
    %313 = vector.broadcast %c7_i32 : i32 to vector<8x128xi32>
    %314 = arith.cmpi eq, %4, %313 : vector<8x128xi32>
    %315 = vector.shape_cast %312 : vector<8x1xi32> to vector<8x1xi32>
    %316 = vector.broadcast %315 : vector<8x1xi32> to vector<8x128xi32>
    %317 = arith.select %314, %316, %276 : vector<8x128xi1>, vector<8x128xi32>
    %318 = vector.broadcast %312 : vector<8x1xi32> to vector<8x128xi32>
    %319 = arith.cmpi eq, %3, %318 : vector<8x128xi32>
    %320 = arith.extui %319 : vector<8x128xi1> to vector<8x128xi32>
    %321 = arith.sitofp %320 : vector<8x128xi32> to vector<8x128xf32>
    %322 = arith.truncf %321 : vector<8x128xf32> to vector<8x128xbf16>
    %cst_76 = arith.constant dense<0.000000e+00> : vector<8x128xf32>
    %323 = tpu.matmul %322, %1, %cst_76 {dimension_numbers = #tpu.dot_dimension_numbers<[1], [0], [0], [1], [0, 0, 1, 1], [], []>} : vector<8x128xbf16>, vector<128x128xbf16>, vector<8x128xf32> -> vector<8x128xf32>
    %324 = arith.addf %300, %323 : vector<8x128xf32>
    %325 = math.tanh %324 : vector<8x128xf32>
    %cst_77 = arith.constant 5.000000e-01 : f32
    %326 = vector.broadcast %cst_77 : f32 to vector<8x1xf32>
    %327 = arith.cmpf ogt, %294, %326 : vector<8x1xf32>
    %328 = vector.shape_cast %327 : vector<8x1xi1> to vector<8x1xi1>
    %329 = vector.broadcast %328 : vector<8x1xi1> to vector<8x128xi1>
    %330 = arith.select %329, %289, %325 : vector<8x128xi1>, vector<8x128xf32>
    %c0_i32_78 = arith.constant 0 : i32
    %331 = vector.broadcast %c0_i32_78 : i32 to vector<8x1xi32>
    %332 = arith.cmpi eq, %312, %331 : vector<8x1xi32>
    %333 = arith.extui %332 : vector<8x1xi1> to vector<8x1xi32>
    %334 = arith.sitofp %333 : vector<8x1xi32> to vector<8x1xf32>
    %335 = arith.maximumf %294, %334 : vector<8x1xf32>
    %c8_i32 = arith.constant 8 : i32
    %c0_79 = arith.constant 0 : index
    %c0_80 = arith.constant 0 : index
    %336 = vector.load %arg5[%c0_79, %c0_80] : memref<8x128xi32, #tpu.memory_space<vmem>>, vector<8x128xi32>
    tpu.vector_store %arg5[%c0_79, %c0_80], %317 {strides = array<i32>} : memref<8x128xi32, #tpu.memory_space<vmem>>, vector<8x128xi32>,
    %c0_81 = arith.constant 0 : index
    %c0_82 = arith.constant 0 : index
    %337 = vector.load %arg6[%c0_81, %c0_82] : memref<8x128xf32, #tpu.memory_space<vmem>>, vector<8x128xf32>
    tpu.vector_store %arg6[%c0_81, %c0_82], %330 {strides = array<i32>} : memref<8x128xf32, #tpu.memory_space<vmem>>, vector<8x128xf32>,
    return
  }
  func.func @transform_0(%arg0: i32) -> (i32, i32) {
    %c0_i32 = arith.constant 0 : i32
    %c0_i32_0 = arith.constant 0 : i32
    return %arg0, %c0_i32 : i32, i32
  }
  func.func @transform_1(%arg0: i32) -> (i32, i32) {
    %c0_i32 = arith.constant 0 : i32
    %c0_i32_0 = arith.constant 0 : i32
    %c0_i32_1 = arith.constant 0 : i32
    return %c0_i32, %c0_i32_0 : i32, i32
  }
  func.func @transform_2(%arg0: i32) -> (i32, i32) {
    %c0_i32 = arith.constant 0 : i32
    %c0_i32_0 = arith.constant 0 : i32
    %c0_i32_1 = arith.constant 0 : i32
    return %c0_i32, %c0_i32_0 : i32, i32
  }
  func.func @transform_3(%arg0: i32) -> (i32, i32) {
    %c0_i32 = arith.constant 0 : i32
    %c0_i32_0 = arith.constant 0 : i32
    %c0_i32_1 = arith.constant 0 : i32
    return %c0_i32, %c0_i32_0 : i32, i32
  }
  func.func @transform_4(%arg0: i32) -> (i32, i32) {
    %c0_i32 = arith.constant 0 : i32
    %c0_i32_0 = arith.constant 0 : i32
    return %arg0, %c0_i32 : i32, i32
  }
  func.func @transform_5(%arg0: i32) -> (i32, i32) {
    %c0_i32 = arith.constant 0 : i32
    %c0_i32_0 = arith.constant 0 : i32
    return %arg0, %c0_i32 : i32, i32
  }
}

</mosaic_0001>

<llo_original>
// kernel: greedy_decode.1
$region0: #{greedy_decode.1}
  #allocation0 [shape = 'u32[]', space=smem, size = 0x4, offset = 0x4, fixed_abs, tag = 'smem constant byte address 0x4 - core index']
  #allocation1 [shape = 'u32[144,128]{1,0:T(1,128)}', space=vmem, size = 0x12000, scoped, tag = 'internal scratch']
  %s0 = inlined_call_operand.vmem [shape: f32[8,128], index: 0, kind: input, shape index: {}]
  %s1 = inlined_call_operand.vmem [shape: bf16[128,256], index: 1, kind: input, shape index: {}]
  %s2 = inlined_call_operand.vmem [shape: f32[1,128], index: 2, kind: input, shape index: {}]
  %s3 = inlined_call_operand.vmem [shape: bf16[128,128], index: 3, kind: input, shape index: {}]
  %s4 = inlined_call_operand.hbm [shape: s32[8,128], index: 4, kind: output, shape index: {0}]
  %s5 = inlined_call_operand.hbm [shape: f32[8,128], index: 5, kind: output, shape index: {1}]
  %6 = xla_tuple %s4, %s5
  %s7 = sld [smem:[#allocation0]]
  $region34: #{greedy_decode.1} parent=0
    _
  %s9 = ssub.s32 1, %s7
  %s10 = scalar_select 0, %s9, %s7
  $region1: #{greedy_decode.1} parent=0
    #allocation2 [shape = 'u8[4096]{0}', space=vmem, size = 0x1000, scoped, tag = 'output window, operand 0, single buffered']
    #allocation3 [shape = 's32[1]{0}', space=sflag, size = 0x4, scoped, tag = 'scoped memory for greedy_decode.1']
    #allocation4 [shape = 'u8[4096]{0}', space=vmem, size = 0x1000, scoped, tag = 'output window, operand 1, single buffered']
    #allocation5 [shape = 's32[1]{0}', space=sflag, size = 0x4, scoped, tag = 'scoped memory for greedy_decode.1']
    %11 = vsyncpa [#allocation3], 0
    %12 = vsyncpa [#allocation5], 0
    // Predicated region
    $region2: #{greedy_decode.1} parent=1 // pred_check
      _
    $region3: #{greedy_decode.1} parent=1 // pred_check_branch
      %14 = sbr.rel (0) target = $region5
    $region4: #{greedy_decode.1} parent=1 // pred_region
      _
    $region5: #{greedy_decode.1} parent=1 // pred_fallthru
      _
    // Predicated region
    $region6: #{greedy_decode.1} parent=1 // pred_check
      _
    $region7: #{greedy_decode.1} parent=1 // pred_check_branch
      %16 = sbr.rel (0) target = $region9
    $region8: #{greedy_decode.1} parent=1 // pred_region
      _
    $region9: #{greedy_decode.1} parent=1 // pred_fallthru
      _
    // Predicated region
    $region10: #{greedy_decode.1} parent=1 // pred_check
      _
    $region11: #{greedy_decode.1} parent=1 // pred_check_branch
      %18 = sbr.rel (0) target = $region13
    $region12: #{greedy_decode.1} parent=1 // pred_region
      _
    $region13: #{greedy_decode.1} parent=1 // pred_fallthru
      _
    // Predicated region
    $region14: #{greedy_decode.1} parent=1 // pred_check
      _
    $region15: #{greedy_decode.1} parent=1 // pred_check_branch
      %20 = sbr.rel (0) target = $region17
    $region16: #{greedy_decode.1} parent=1 // pred_region
      _
    $region17: #{greedy_decode.1} parent=1 // pred_fallthru
      _
    %v22 = vld [vmem:[%s1] sm:$0xff]
    %v23 = vld [vmem:[%s1 + $0x8] sm:$0xff]
    %v24 = vld [vmem:[%s1 + $0x10] sm:$0xff]
    %v25 = vld [vmem:[%s1 + $0x18] sm:$0xff]
    %v26 = vld [vmem:[%s1 + $0x20] sm:$0xff]
    %v27 = vld [vmem:[%s1 + $0x28] sm:$0xff]
    %v28 = vld [vmem:[%s1 + $0x30] sm:$0xff]
    %v29 = vld [vmem:[%s1 + $0x38] sm:$0xff]
    %v30 = vld [vmem:[%s1 + $0x40] sm:$0xff]
    %v31 = vld [vmem:[%s1 + $0x48] sm:$0xff]
    %v32 = vld [vmem:[%s1 + $0x50] sm:$0xff]
    %v33 = vld [vmem:[%s1 + $0x58] sm:$0xff]
    %v34 = vld [vmem:[%s1 + $0x60] sm:$0xff]
    %v35 = vld [vmem:[%s1 + $0x68] sm:$0xff]
    %v36 = vld [vmem:[%s1 + $0x70] sm:$0xff]
    %v37 = vld [vmem:[%s1 + $0x78] sm:$0xff]
    %v38 = vld [vmem:[%s3] sm:$0xf]
    %v39 = vld [vmem:[%s3 + $0x4] sm:$0xf]
    %v40 = vld [vmem:[%s3 + $0x8] sm:$0xf]
    %v41 = vld [vmem:[%s3 + $0xc] sm:$0xf]
    %v42 = vld [vmem:[%s3 + $0x10] sm:$0xf]
    %v43 = vld [vmem:[%s3 + $0x14] sm:$0xf]
    %v44 = vld [vmem:[%s3 + $0x18] sm:$0xf]
    %v45 = vld [vmem:[%s3 + $0x1c] sm:$0xf]
    %v46 = vld [vmem:[%s3 + $0x20] sm:$0xf]
    %v47 = vld [vmem:[%s3 + $0x24] sm:$0xf]
    %v48 = vld [vmem:[%s3 + $0x28] sm:$0xf]
    %v49 = vld [vmem:[%s3 + $0x2c] sm:$0xf]
    %v50 = vld [vmem:[%s3 + $0x30] sm:$0xf]
    %v51 = vld [vmem:[%s3 + $0x34] sm:$0xf]
    %v52 = vld [vmem:[%s3 + $0x38] sm:$0xf]
    %v53 = vld [vmem:[%s3 + $0x3c] sm:$0xf]
    %v54 = vld [vmem:[%s2] sm:$0x1]
    %v55 = vlaneseq
    %v56 = vand.u32 %v55, 127
    %v57 = vld [vmem:[%s0] sm:$0xff]
    %v58 = vpack.c.bf16 %v57, %v57
    %v75 = vunpack.c.l.b16 %v22
    %v76 = vunpack.c.h.b16 %v22
    %v77 = vunpack.c.l.b16 %v23
    %v78 = vunpack.c.h.b16 %v23
    %v79 = vunpack.c.l.b16 %v24
    %v80 = vunpack.c.h.b16 %v24
    %v81 = vunpack.c.l.b16 %v25
    %v82 = vunpack.c.h.b16 %v25
    %v83 = vunpack.c.l.b16 %v26
    %v84 = vunpack.c.h.b16 %v26
    %v85 = vunpack.c.l.b16 %v27
    %v86 = vunpack.c.h.b16 %v27
    %v87 = vunpack.c.l.b16 %v28
    %v88 = vunpack.c.h.b16 %v28
    %v89 = vunpack.c.l.b16 %v29
    %v90 = vunpack.c.h.b16 %v29
    %v91 = vunpack.c.l.b16 %v30
    %v92 = vunpack.c.h.b16 %v30
    %v93 = vunpack.c.l.b16 %v31
    %v94 = vunpack.c.h.b16 %v31
    %v95 = vunpack.c.l.b16 %v32
    %v96 = vunpack.c.h.b16 %v32
    %v97 = vunpack.c.l.b16 %v33
    %v98 = vunpack.c.h.b16 %v33
    %v99 = vunpack.c.l.b16 %v34
    %v100 = vunpack.c.h.b16 %v34
    %v101 = vunpack.c.l.b16 %v35
    %v102 = vunpack.c.h.b16 %v35
    %v103 = vunpack.c.l.b16 %v36
    %v104 = vunpack.c.h.b16 %v36
    %v105 = vunpack.c.l.b16 %v37
    %v106 = vunpack.c.h.b16 %v37
    %v107 = vpack.c.b16 %v77, %v75
    %v108 = vpack.c.b16 %v78, %v76
    %v109 = vpack.c.b16 %v81, %v79
    %v110 = vpack.c.b16 %v82, %v80
    %v111 = vpack.c.b16 %v85, %v83
    %v112 = vpack.c.b16 %v86, %v84
    %v113 = vpack.c.b16 %v89, %v87
    %v114 = vpack.c.b16 %v90, %v88
    %v115 = vpack.c.b16 %v93, %v91
    %v116 = vpack.c.b16 %v94, %v92
    %v117 = vpack.c.b16 %v97, %v95
    %v118 = vpack.c.b16 %v98, %v96
    %v119 = vpack.c.b16 %v101, %v99
    %v120 = vpack.c.b16 %v102, %v100
    %v121 = vpack.c.b16 %v105, %v103
    %v122 = vpack.c.b16 %v106, %v104
    %139 = vmatprep.subr.bf16.mxu0 %v122
    %140 = vmatpush1.bf16.msra.mxu0 %v121
    %141 = vmatprep.subr.bf16.mxu0 %v120
    %142 = vmatpush1.bf16.msra.mxu0 %v119
    %143 = vmatprep.subr.bf16.mxu0 %v118
    %144 = vmatpush1.bf16.msra.mxu0 %v117
    %145 = vmatprep.subr.bf16.mxu0 %v116
    %146 = vmatpush1.bf16.msra.mxu0 %v115
    %147 = vmatprep.subr.bf16.mxu0 %v114
    %148 = vmatpush1.bf16.msra.mxu0 %v113
    %149 = vmatprep.subr.bf16.mxu0 %v112
    %150 = vmatpush1.bf16.msra.mxu0 %v111
    %151 = vmatprep.subr.bf16.mxu0 %v110
    %152 = vmatpush1.bf16.msra.mxu0 %v109
    %153 = vmatprep.subr.bf16.mxu0 %v108
    %154 = vmatpush1.bf16.msra.mxu0 %v107
    %155 = vmatprep.subr.bf16.mxu0 0
    %156 = vmatpush2.bf16.msra.mxu0 0
    %157 = vmatprep.subr.bf16.mxu0 0
    %158 = vmatpush2.bf16.msra.mxu0 0
    %159 = vmatprep.subr.bf16.mxu0 0
    %160 = vmatpush2.bf16.msra.mxu0 0
    %161 = vmatprep.subr.bf16.mxu0 0
    %162 = vmatpush2.bf16.msra.mxu0 0
    %163 = vmatprep.subr.bf16.mxu0 0
    %164 = vmatpush2.bf16.msra.mxu0 0
    %165 = vmatprep.subr.bf16.mxu0 0
    %166 = vmatpush2.bf16.msra.mxu0 0
    %167 = vmatprep.subr.bf16.mxu0 0
    %168 = vmatpush2.bf16.msra.mxu0 0
    %169 = vmatprep.subr.bf16.mxu0 0
    %170 = vmatpush2.bf16.msra.mxu0 0
    %171 = vmatprep.mubr.bf16.mxu0 0
    %172 = vmatmul.mubr.bf16.gmra.mxu0 %v58
    %v173 = vpop.f32.mrf.mxu0
    %v174 = vadd.f32 0.0, %v173
    %v175 = vpop.f32.mrf.mxu0
    %v176 = vadd.f32 0.0, %v175
    %v177 = vpop.f32.mrf.mxu0
    %v178 = vpop.f32.mrf.mxu0
    %179 = vdwg.mxu0
    %v181 = vlaneseq
    %v182 = vshrl.u32 %v181, 7
    %v183 = vsub.s32 0, %v182
    %v184 = vrot.slane %v54, %v183
    %v186 = vadd.f32 %v174, %v184
    %187 = vmax.xlane.f32.xlu0 %v186
    %v188 = vpop.xlane.xlu0 %187
    %vm189 = vcmp.eq.f32.partialorder %v186, %v188
    %v190 = vsel %vm189, %v56, 128
    %v191 = vand.u32 %v190, 65535
    %v192 = vshra.s32 %v190, 16
    %v193 = vcvt.s32.f32 %v191
    %v194 = vcvt.s32.f32 %v192
    %195 = vmin.xlane.f32.xlu0 %v194
    %v196 = vpop.xlane.xlu0 %195
    %vm197 = vcmp.eq.f32.partialorder %v194, %v196
    %v198 = vsel %vm197, %v193, inf
    %199 = vmin.xlane.f32.xlu0 %v198
    %v200 = vpop.xlane.xlu0 %199
    %v201 = vcvt.f32.s32 %v200
    %v202 = vcvt.f32.s32 %v196
    %v203 = vshll.u32 %v202, 16
    %v204 = vadd.s32 %v203, %v201
    %vm205 = vcmp.gt.f32.partialorder 0.0, 0.5
    %v206 = vsel %vm205, 0, %v204
    %vm207 = vcmp.eq.s32.totalorder %v56, 0
    %v208 = vsel %vm207, %v206, 0
    %vm209 = vcmp.eq.s32.totalorder %v56, %v206
    %v210 = vsel %vm209, 1, 0
    %v211 = vcvt.s32.f32 %v210
    %v212 = vpack.c.bf16 %v211, %v211
    %v229 = vunpack.c.l.b16 %v38
    %v230 = vunpack.c.l.b16 %v39
    %v231 = vunpack.c.l.b16 %v40
    %v232 = vunpack.c.l.b16 %v41
    %v233 = vunpack.c.l.b16 %v42
    %v234 = vunpack.c.l.b16 %v43
    %v235 = vunpack.c.l.b16 %v44
    %v236 = vunpack.c.l.b16 %v45
    %v237 = vunpack.c.l.b16 %v46
    %v238 = vunpack.c.l.b16 %v47
    %v239 = vunpack.c.l.b16 %v48
    %v240 = vunpack.c.l.b16 %v49
    %v241 = vunpack.c.l.b16 %v50
    %v242 = vunpack.c.l.b16 %v51
    %v243 = vunpack.c.l.b16 %v52
    %v244 = vunpack.c.l.b16 %v53
    %v245 = vpack.c.b16 %v230, %v229
    %v246 = vpack.c.b16 %v232, %v231
    %v247 = vpack.c.b16 %v234, %v233
    %v248 = vpack.c.b16 %v236, %v235
    %v249 = vpack.c.b16 %v238, %v237
    %v250 = vpack.c.b16 %v240, %v239
    %v251 = vpack.c.b16 %v242, %v241
    %v252 = vpack.c.b16 %v244, %v243
    %261 = vmatprep.subr.bf16.mxu0 0
    %262 = vmatpush1.bf16.msra.mxu0 %v252
    %263 = vmatprep.subr.bf16.mxu0 0
    %264 = vmatpush1.bf16.msra.mxu0 %v251
    %265 = vmatprep.subr.bf16.mxu0 0
    %266 = vmatpush1.bf16.msra.mxu0 %v250
    %267 = vmatprep.subr.bf16.mxu0 0
    %268 = vmatpush1.bf16.msra.mxu0 %v249
    %269 = vmatprep.subr.bf16.mxu0 0
    %270 = vmatpush1.bf16.msra.mxu0 %v248
    %271 = vmatprep.subr.bf16.mxu0 0
    %272 = vmatpush1.bf16.msra.mxu0 %v247
    %273 = vmatprep.subr.bf16.mxu0 0
    %274 = vmatpush1.bf16.msra.mxu0 %v246
    %275 = vmatprep.subr.bf16.mxu0 0
    %276 = vmatpush1.bf16.msra.mxu0 %v245
    %277 = vmatprep.subr.bf16.mxu0 0
    %278 = vmatpush2.bf16.msra.mxu0 0
    %279 = vmatprep.subr.bf16.mxu0 0
    %280 = vmatpush2.bf16.msra.mxu0 0
    %281 = vmatprep.subr.bf16.mxu0 0
    %282 = vmatpush2.bf16.msra.mxu0 0
    %283 = vmatprep.subr.bf16.mxu0 0
    %284 = vmatpush2.bf16.msra.mxu0 0
    %285 = vmatprep.subr.bf16.mxu0 0
    %286 = vmatpush2.bf16.msra.mxu0 0
    %287 = vmatprep.subr.bf16.mxu0 0
    %288 = vmatpush2.bf16.msra.mxu0 0
    %289 = vmatprep.subr.bf16.mxu0 0
    %290 = vmatpush2.bf16.msra.mxu0 0
    %291 = vmatprep.subr.bf16.mxu0 0
    %292 = vmatpush2.bf16.msra.mxu0 0
    %293 = vmatprep.mubr.bf16.mxu0 0
    %294 = vmatmul.mubr.bf16.gmra.mxu0 %v212
    %v295 = vpop.f32.mrf.mxu0
    %v296 = vadd.f32 0.0, %v295
    %v297 = vpop.f32.mrf.mxu0
    %v298 = vpop.f32.mrf.mxu0
    %v299 = vpop.f32.mrf.mxu0
    %300 = vdwg.mxu0
    %v301 = vadd.f32 %v176, %v296
    %v302 = vtanh.pop %v301
    %v303 = vsel %vm205, 1, 0
    %vm304 = vcmp.eq.s32.totalorder %v303, 1
    %v305 = vsel %vm304, %v57, %v302
    %vm306 = vcmp.eq.s32.totalorder %v206, 0
    %v307 = vsel %vm306, 1, 0
    %v308 = vcvt.s32.f32 %v307
    %v309 = vmax.f32 %v308, 0.0
    %v310 = vpack.c.bf16 %v305, %v305
    %311 = vmatprep.subr.bf16.mxu0 %v122
    %312 = vmatpush1.bf16.msra.mxu0 %v121
    %313 = vmatprep.subr.bf16.mxu0 %v120
    %314 = vmatpush1.bf16.msra.mxu0 %v119
    %315 = vmatprep.subr.bf16.mxu0 %v118
    %316 = vmatpush1.bf16.msra.mxu0 %v117
    %317 = vmatprep.subr.bf16.mxu0 %v116
    %318 = vmatpush1.bf16.msra.mxu0 %v115
    %319 = vmatprep.subr.bf16.mxu0 %v114
    %320 = vmatpush1.bf16.msra.mxu0 %v113
    %321 = vmatprep.subr.bf16.mxu0 %v112
    %322 = vmatpush1.bf16.msra.mxu0 %v111
    %323 = vmatprep.subr.bf16.mxu0 %v110
    %324 = vmatpush1.bf16.msra.mxu0 %v109
    %325 = vmatprep.subr.bf16.mxu0 %v108
    %326 = vmatpush1.bf16.msra.mxu0 %v107
    %327 = vmatprep.subr.bf16.mxu0 0
    %328 = vmatpush2.bf16.msra.mxu0 0
    %329 = vmatprep.subr.bf16.mxu0 0
    %330 = vmatpush2.bf16.msra.mxu0 0
    %331 = vmatprep.subr.bf16.mxu0 0
    %332 = vmatpush2.bf16.msra.mxu0 0
    %333 = vmatprep.subr.bf16.mxu0 0
    %334 = vmatpush2.bf16.msra.mxu0 0
    %335 = vmatprep.subr.bf16.mxu0 0
    %336 = vmatpush2.bf16.msra.mxu0 0
    %337 = vmatprep.subr.bf16.mxu0 0
    %338 = vmatpush2.bf16.msra.mxu0 0
    %339 = vmatprep.subr.bf16.mxu0 0
    %340 = vmatpush2.bf16.msra.mxu0 0
    %341 = vmatprep.subr.bf16.mxu0 0
    %342 = vmatpush2.bf16.msra.mxu0 0
    %343 = vmatprep.mubr.bf16.mxu0 0
    %344 = vmatmul.mubr.bf16.gmra.mxu0 %v310
    %v345 = vpop.f32.mrf.mxu0
    %v346 = vadd.f32 0.0, %v345
    %v347 = vpop.f32.mrf.mxu0
    %v348 = vadd.f32 0.0, %v347
    %v349 = vpop.f32.mrf.mxu0
    %v350 = vpop.f32.mrf.mxu0
    %351 = vdwg.mxu0
    %v352 = vadd.f32 %v346, %v184
    %353 = vmax.xlane.f32.xlu0 %v352
    %v354 = vpop.xlane.xlu0 %353
    %vm355 = vcmp.eq.f32.partialorder %v352, %v354
    %v356 = vsel %vm355, %v56, 128
    %v357 = vand.u32 %v356, 65535
    %v358 = vshra.s32 %v356, 16
    %v359 = vcvt.s32.f32 %v357
    %v360 = vcvt.s32.f32 %v358
    %361 = vmin.xlane.f32.xlu0 %v360
    %v362 = vpop.xlane.xlu0 %361
    %vm363 = vcmp.eq.f32.partialorder %v360, %v362
    %v364 = vsel %vm363, %v359, inf
    %365 = vmin.xlane.f32.xlu0 %v364
    %v366 = vpop.xlane.xlu0 %365
    %v367 = vcvt.f32.s32 %v366
    %v368 = vcvt.f32.s32 %v362
    %v369 = vshll.u32 %v368, 16
    %v370 = vadd.s32 %v369, %v367
    %vm371 = vcmp.gt.f32.partialorder %v309, 0.5
    %v372 = vsel %vm371, 0, %v370
    %vm373 = vcmp.eq.s32.totalorder %v56, 1
    %v374 = vsel %vm373, %v372, %v208
    %vm375 = vcmp.eq.s32.totalorder %v56, %v372
    %v376 = vsel %vm375, 1, 0
    %v377 = vcvt.s32.f32 %v376
    %v378 = vpack.c.bf16 %v377, %v377
    %379 = vmatprep.subr.bf16.mxu0 0
    %380 = vmatpush1.bf16.msra.mxu0 %v252
    %381 = vmatprep.subr.bf16.mxu0 0
    %382 = vmatpush1.bf16.msra.mxu0 %v251
    %383 = vmatprep.subr.bf16.mxu0 0
    %384 = vmatpush1.bf16.msra.mxu0 %v250
    %385 = vmatprep.subr.bf16.mxu0 0
    %386 = vmatpush1.bf16.msra.mxu0 %v249
    %387 = vmatprep.subr.bf16.mxu0 0
    %388 = vmatpush1.bf16.msra.mxu0 %v248
    %389 = vmatprep.subr.bf16.mxu0 0
    %390 = vmatpush1.bf16.msra.mxu0 %v247
    %391 = vmatprep.subr.bf16.mxu0 0
    %392 = vmatpush1.bf16.msra.mxu0 %v246
    %393 = vmatprep.subr.bf16.mxu0 0
    %394 = vmatpush1.bf16.msra.mxu0 %v245
    %395 = vmatprep.subr.bf16.mxu0 0
    %396 = vmatpush2.bf16.msra.mxu0 0
    %397 = vmatprep.subr.bf16.mxu0 0
    %398 = vmatpush2.bf16.msra.mxu0 0
    %399 = vmatprep.subr.bf16.mxu0 0
    %400 = vmatpush2.bf16.msra.mxu0 0
    %401 = vmatprep.subr.bf16.mxu0 0
    %402 = vmatpush2.bf16.msra.mxu0 0
    %403 = vmatprep.subr.bf16.mxu0 0
    %404 = vmatpush2.bf16.msra.mxu0 0
    %405 = vmatprep.subr.bf16.mxu0 0
    %406 = vmatpush2.bf16.msra.mxu0 0
    %407 = vmatprep.subr.bf16.mxu0 0
    %408 = vmatpush2.bf16.msra.mxu0 0
    %409 = vmatprep.subr.bf16.mxu0 0
    %410 = vmatpush2.bf16.msra.mxu0 0
    %411 = vmatprep.mubr.bf16.mxu0 0
    %412 = vmatmul.mubr.bf16.gmra.mxu0 %v378
    %v413 = vpop.f32.mrf.mxu0
    %v414 = vadd.f32 0.0, %v413
    %v415 = vpop.f32.mrf.mxu0
    %v416 = vpop.f32.mrf.mxu0
    %v417 = vpop.f32.mrf.mxu0
    %418 = vdwg.mxu0
    %v419 = vadd.f32 %v348, %v414
    %v420 = vtanh.pop %v419
    %v421 = vsel %vm371, 1, 0
    %vm422 = vcmp.eq.s32.totalorder %v421, 1
    %v423 = vsel %vm422, %v305, %v420
    %vm424 = vcmp.eq.s32.totalorder %v372, 0
    %v425 = vsel %vm424, 1, 0
    %v426 = vcvt.s32.f32 %v425
    %v427 = vmax.f32 %v309, %v426
    %v428 = vpack.c.bf16 %v423, %v423
    %429 = vmatprep.subr.bf16.mxu0 %v122
    %430 = vmatpush1.bf16.msra.mxu0 %v121
    %431 = vmatprep.subr.bf16.mxu0 %v120
    %432 = vmatpush1.bf16.msra.mxu0 %v119
    %433 = vmatprep.subr.bf16.mxu0 %v118
    %434 = vmatpush1.bf16.msra.mxu0 %v117
    %435 = vmatprep.subr.bf16.mxu0 %v116
    %436 = vmatpush1.bf16.msra.mxu0 %v115
    %437 = vmatprep.subr.bf16.mxu0 %v114
    %438 = vmatpush1.bf16.msra.mxu0 %v113
    %439 = vmatprep.subr.bf16.mxu0 %v112
    %440 = vmatpush1.bf16.msra.mxu0 %v111
    %441 = vmatprep.subr.bf16.mxu0 %v110
    %442 = vmatpush1.bf16.msra.mxu0 %v109
    %443 = vmatprep.subr.bf16.mxu0 %v108
    %444 = vmatpush1.bf16.msra.mxu0 %v107
    %445 = vmatprep.subr.bf16.mxu0 0
    %446 = vmatpush2.bf16.msra.mxu0 0
    %447 = vmatprep.subr.bf16.mxu0 0
    %448 = vmatpush2.bf16.msra.mxu0 0
    %449 = vmatprep.subr.bf16.mxu0 0
    %450 = vmatpush2.bf16.msra.mxu0 0
    %451 = vmatprep.subr.bf16.mxu0 0
    %452 = vmatpush2.bf16.msra.mxu0 0
    %453 = vmatprep.subr.bf16.mxu0 0
    %454 = vmatpush2.bf16.msra.mxu0 0
    %455 = vmatprep.subr.bf16.mxu0 0
    %456 = vmatpush2.bf16.msra.mxu0 0
    %457 = vmatprep.subr.bf16.mxu0 0
    %458 = vmatpush2.bf16.msra.mxu0 0
    %459 = vmatprep.subr.bf16.mxu0 0
    %460 = vmatpush2.bf16.msra.mxu0 0
    %461 = vmatprep.mubr.bf16.mxu0 0
    %462 = vmatmul.mubr.bf16.gmra.mxu0 %v428
    %v463 = vpop.f32.mrf.mxu0
    %v464 = vadd.f32 0.0, %v463
    %v465 = vpop.f32.mrf.mxu0
    %v466 = vadd.f32 0.0, %v465
    %v467 = vpop.f32.mrf.mxu0
    %v468 = vpop.f32.mrf.mxu0
    %469 = vdwg.mxu0
    %v470 = vadd.f32 %v464, %v184
    %471 = vmax.xlane.f32.xlu0 %v470
    %v472 = vpop.xlane.xlu0 %471
    %vm473 = vcmp.eq.f32.partialorder %v470, %v472
    %v474 = vsel %vm473, %v56, 128
    %v475 = vand.u32 %v474, 65535
    %v476 = vshra.s32 %v474, 16
    %v477 = vcvt.s32.f32 %v475
    %v478 = vcvt.s32.f32 %v476
    %479 = vmin.xlane.f32.xlu0 %v478
    %v480 = vpop.xlane.xlu0 %479
    %vm481 = vcmp.eq.f32.partialorder %v478, %v480
    %v482 = vsel %vm481, %v477, inf
    %483 = vmin.xlane.f32.xlu0 %v482
    %v484 = vpop.xlane.xlu0 %483
    %v485 = vcvt.f32.s32 %v484
    %v486 = vcvt.f32.s32 %v480
    %v487 = vshll.u32 %v486, 16
    %v488 = vadd.s32 %v487, %v485
    %vm489 = vcmp.gt.f32.partialorder %v427, 0.5
    %v490 = vsel %vm489, 0, %v488
    %vm491 = vcmp.eq.s32.totalorder %v56, 2
    %v492 = vsel %vm491, %v490, %v374
    %vm493 = vcmp.eq.s32.totalorder %v56, %v490
    %v494 = vsel %vm493, 1, 0
    %v495 = vcvt.s32.f32 %v494
    %v496 = vpack.c.bf16 %v495, %v495
    %497 = vmatprep.subr.bf16.mxu0 0
    %498 = vmatpush1.bf16.msra.mxu0 %v252
    %499 = vmatprep.subr.bf16.mxu0 0
    %500 = vmatpush1.bf16.msra.mxu0 %v251
    %501 = vmatprep.subr.bf16.mxu0 0
    %502 = vmatpush1.bf16.msra.mxu0 %v250
    %503 = vmatprep.subr.bf16.mxu0 0
    %504 = vmatpush1.bf16.msra.mxu0 %v249
    %505 = vmatprep.subr.bf16.mxu0 0
    %506 = vmatpush1.bf16.msra.mxu0 %v248
    %507 = vmatprep.subr.bf16.mxu0 0
    %508 = vmatpush1.bf16.msra.mxu0 %v247
    %509 = vmatprep.subr.bf16.mxu0 0
    %510 = vmatpush1.bf16.msra.mxu0 %v246
    %511 = vmatprep.subr.bf16.mxu0 0
    %512 = vmatpush1.bf16.msra.mxu0 %v245
    %513 = vmatprep.subr.bf16.mxu0 0
    %514 = vmatpush2.bf16.msra.mxu0 0
    %515 = vmatprep.subr.bf16.mxu0 0
    %516 = vmatpush2.bf16.msra.mxu0 0
    %517 = vmatprep.subr.bf16.mxu0 0
    %518 = vmatpush2.bf16.msra.mxu0 0
    %519 = vmatprep.subr.bf16.mxu0 0
    %520 = vmatpush2.bf16.msra.mxu0 0
    %521 = vmatprep.subr.bf16.mxu0 0
    %522 = vmatpush2.bf16.msra.mxu0 0
    %523 = vmatprep.subr.bf16.mxu0 0
    %524 = vmatpush2.bf16.msra.mxu0 0
    %525 = vmatprep.subr.bf16.mxu0 0
    %526 = vmatpush2.bf16.msra.mxu0 0
    %527 = vmatprep.subr.bf16.mxu0 0
    %528 = vmatpush2.bf16.msra.mxu0 0
    %529 = vmatprep.mubr.bf16.mxu0 0
    %530 = vmatmul.mubr.bf16.gmra.mxu0 %v496
    %v531 = vpop.f32.mrf.mxu0
    %v532 = vadd.f32 0.0, %v531
    %v533 = vpop.f32.mrf.mxu0
    %v534 = vpop.f32.mrf.mxu0
    %v535 = vpop.f32.mrf.mxu0
    %536 = vdwg.mxu0
    %v537 = vadd.f32 %v466, %v532
    %v538 = vtanh.pop %v537
    %v539 = vsel %vm489, 1, 0
    %vm540 = vcmp.eq.s32.totalorder %v539, 1
    %v541 = vsel %vm540, %v423, %v538
    %vm542 = vcmp.eq.s32.totalorder %v490, 0
    %v543 = vsel %vm542, 1, 0
    %v544 = vcvt.s32.f32 %v543
    %v545 = vmax.f32 %v427, %v544
    %v546 = vpack.c.bf16 %v541, %v541
    %547 = vmatprep.subr.bf16.mxu0 %v122
    %548 = vmatpush1.bf16.msra.mxu0 %v121
    %549 = vmatprep.subr.bf16.mxu0 %v120
    %550 = vmatpush1.bf16.msra.mxu0 %v119
    %551 = vmatprep.subr.bf16.mxu0 %v118
    %552 = vmatpush1.bf16.msra.mxu0 %v117
    %553 = vmatprep.subr.bf16.mxu0 %v116
    %554 = vmatpush1.bf16.msra.mxu0 %v115
    %555 = vmatprep.subr.bf16.mxu0 %v114
    %556 = vmatpush1.bf16.msra.mxu0 %v113
    %557 = vmatprep.subr.bf16.mxu0 %v112
    %558 = vmatpush1.bf16.msra.mxu0 %v111
    %559 = vmatprep.subr.bf16.mxu0 %v110
    %560 = vmatpush1.bf16.msra.mxu0 %v109
    %561 = vmatprep.subr.bf16.mxu0 %v108
    %562 = vmatpush1.bf16.msra.mxu0 %v107
    %563 = vmatprep.subr.bf16.mxu0 0
    %564 = vmatpush2.bf16.msra.mxu0 0
    %565 = vmatprep.subr.bf16.mxu0 0
    %566 = vmatpush2.bf16.msra.mxu0 0
    %567 = vmatprep.subr.bf16.mxu0 0
    %568 = vmatpush2.bf16.msra.mxu0 0
    %569 = vmatprep.subr.bf16.mxu0 0
    %570 = vmatpush2.bf16.msra.mxu0 0
    %571 = vmatprep.subr.bf16.mxu0 0
    %572 = vmatpush2.bf16.msra.mxu0 0
    %573 = vmatprep.subr.bf16.mxu0 0
    %574 = vmatpush2.bf16.msra.mxu0 0
    %575 = vmatprep.subr.bf16.mxu0 0
    %576 = vmatpush2.bf16.msra.mxu0 0
    %577 = vmatprep.subr.bf16.mxu0 0
    %578 = vmatpush2.bf16.msra.mxu0 0
    %579 = vmatprep.mubr.bf16.mxu0 0
    %580 = vmatmul.mubr.bf16.gmra.mxu0 %v546
    %v581 = vpop.f32.mrf.mxu0
    %v582 = vadd.f32 0.0, %v581
    %v583 = vpop.f32.mrf.mxu0
    %v584 = vadd.f32 0.0, %v583
    %v585 = vpop.f32.mrf.mxu0
    %v586 = vpop.f32.mrf.mxu0
    %587 = vdwg.mxu0
    %v588 = vadd.f32 %v582, %v184
    %589 = vmax.xlane.f32.xlu0 %v588
    %v590 = vpop.xlane.xlu0 %589
    %vm591 = vcmp.eq.f32.partialorder %v588, %v590
    %v592 = vsel %vm591, %v56, 128
    %v593 = vand.u32 %v592, 65535
    %v594 = vshra.s32 %v592, 16
    %v595 = vcvt.s32.f32 %v593
    %v596 = vcvt.s32.f32 %v594
    %597 = vmin.xlane.f32.xlu0 %v596
    %v598 = vpop.xlane.xlu0 %597
    %vm599 = vcmp.eq.f32.partialorder %v596, %v598
    %v600 = vsel %vm599, %v595, inf
    %601 = vmin.xlane.f32.xlu0 %v600
    %v602 = vpop.xlane.xlu0 %601
    %v603 = vcvt.f32.s32 %v602
    %v604 = vcvt.f32.s32 %v598
    %v605 = vshll.u32 %v604, 16
    %v606 = vadd.s32 %v605, %v603
    %vm607 = vcmp.gt.f32.partialorder %v545, 0.5
    %v608 = vsel %vm607, 0, %v606
    %vm609 = vcmp.eq.s32.totalorder %v56, 3
    %v610 = vsel %vm609, %v608, %v492
    %vm611 = vcmp.eq.s32.totalorder %v56, %v608
    %v612 = vsel %vm611, 1, 0
    %v613 = vcvt.s32.f32 %v612
    %v614 = vpack.c.bf16 %v613, %v613
    %615 = vmatprep.subr.bf16.mxu0 0
    %616 = vmatpush1.bf16.msra.mxu0 %v252
    %617 = vmatprep.subr.bf16.mxu0 0
    %618 = vmatpush1.bf16.msra.mxu0 %v251
    %619 = vmatprep.subr.bf16.mxu0 0
    %620 = vmatpush1.bf16.msra.mxu0 %v250
    %621 = vmatprep.subr.bf16.mxu0 0
    %622 = vmatpush1.bf16.msra.mxu0 %v249
    %623 = vmatprep.subr.bf16.mxu0 0
    %624 = vmatpush1.bf16.msra.mxu0 %v248
    %625 = vmatprep.subr.bf16.mxu0 0
    %626 = vmatpush1.bf16.msra.mxu0 %v247
    %627 = vmatprep.subr.bf16.mxu0 0
    %628 = vmatpush1.bf16.msra.mxu0 %v246
    %629 = vmatprep.subr.bf16.mxu0 0
    %630 = vmatpush1.bf16.msra.mxu0 %v245
    %631 = vmatprep.subr.bf16.mxu0 0
    %632 = vmatpush2.bf16.msra.mxu0 0
    %633 = vmatprep.subr.bf16.mxu0 0
    %634 = vmatpush2.bf16.msra.mxu0 0
    %635 = vmatprep.subr.bf16.mxu0 0
    %636 = vmatpush2.bf16.msra.mxu0 0
    %637 = vmatprep.subr.bf16.mxu0 0
    %638 = vmatpush2.bf16.msra.mxu0 0
    %639 = vmatprep.subr.bf16.mxu0 0
    %640 = vmatpush2.bf16.msra.mxu0 0
    %641 = vmatprep.subr.bf16.mxu0 0
    %642 = vmatpush2.bf16.msra.mxu0 0
    %643 = vmatprep.subr.bf16.mxu0 0
    %644 = vmatpush2.bf16.msra.mxu0 0
    %645 = vmatprep.subr.bf16.mxu0 0
    %646 = vmatpush2.bf16.msra.mxu0 0
    %647 = vmatprep.mubr.bf16.mxu0 0
    %648 = vmatmul.mubr.bf16.gmra.mxu0 %v614
    %v649 = vpop.f32.mrf.mxu0
    %v650 = vadd.f32 0.0, %v649
    %v651 = vpop.f32.mrf.mxu0
    %v652 = vpop.f32.mrf.mxu0
    %v653 = vpop.f32.mrf.mxu0
    %654 = vdwg.mxu0
    %v655 = vadd.f32 %v584, %v650
    %v656 = vtanh.pop %v655
    %v657 = vsel %vm607, 1, 0
    %vm658 = vcmp.eq.s32.totalorder %v657, 1
    %v659 = vsel %vm658, %v541, %v656
    %vm660 = vcmp.eq.s32.totalorder %v608, 0
    %v661 = vsel %vm660, 1, 0
    %v662 = vcvt.s32.f32 %v661
    %v663 = vmax.f32 %v545, %v662
    %v664 = vpack.c.bf16 %v659, %v659
    %665 = vmatprep.subr.bf16.mxu0 %v122
    %666 = vmatpush1.bf16.msra.mxu0 %v121
    %667 = vmatprep.subr.bf16.mxu0 %v120
    %668 = vmatpush1.bf16.msra.mxu0 %v119
    %669 = vmatprep.subr.bf16.mxu0 %v118
    %670 = vmatpush1.bf16.msra.mxu0 %v117
    %671 = vmatprep.subr.bf16.mxu0 %v116
    %672 = vmatpush1.bf16.msra.mxu0 %v115
    %673 = vmatprep.subr.bf16.mxu0 %v114
    %674 = vmatpush1.bf16.msra.mxu0 %v113
    %675 = vmatprep.subr.bf16.mxu0 %v112
    %676 = vmatpush1.bf16.msra.mxu0 %v111
    %677 = vmatprep.subr.bf16.mxu0 %v110
    %678 = vmatpush1.bf16.msra.mxu0 %v109
    %679 = vmatprep.subr.bf16.mxu0 %v108
    %680 = vmatpush1.bf16.msra.mxu0 %v107
    %681 = vmatprep.subr.bf16.mxu0 0
    %682 = vmatpush2.bf16.msra.mxu0 0
    %683 = vmatprep.subr.bf16.mxu0 0
    %684 = vmatpush2.bf16.msra.mxu0 0
    %685 = vmatprep.subr.bf16.mxu0 0
    %686 = vmatpush2.bf16.msra.mxu0 0
    %687 = vmatprep.subr.bf16.mxu0 0
    %688 = vmatpush2.bf16.msra.mxu0 0
    %689 = vmatprep.subr.bf16.mxu0 0
    %690 = vmatpush2.bf16.msra.mxu0 0
    %691 = vmatprep.subr.bf16.mxu0 0
    %692 = vmatpush2.bf16.msra.mxu0 0
    %693 = vmatprep.subr.bf16.mxu0 0
    %694 = vmatpush2.bf16.msra.mxu0 0
    %695 = vmatprep.subr.bf16.mxu0 0
    %696 = vmatpush2.bf16.msra.mxu0 0
    %697 = vmatprep.mubr.bf16.mxu0 0
    %698 = vmatmul.mubr.bf16.gmra.mxu0 %v664
    %v699 = vpop.f32.mrf.mxu0
    %v700 = vadd.f32 0.0, %v699
    %v701 = vpop.f32.mrf.mxu0
    %v702 = vadd.f32 0.0, %v701
    %v703 = vpop.f32.mrf.mxu0
    %v704 = vpop.f32.mrf.mxu0
    %705 = vdwg.mxu0
    %v706 = vadd.f32 %v700, %v184
    %707 = vmax.xlane.f32.xlu0 %v706
    %v708 = vpop.xlane.xlu0 %707
    %vm709 = vcmp.eq.f32.partialorder %v706, %v708
    %v710 = vsel %vm709, %v56, 128
    %v711 = vand.u32 %v710, 65535
    %v712 = vshra.s32 %v710, 16
    %v713 = vcvt.s32.f32 %v711
    %v714 = vcvt.s32.f32 %v712
    %715 = vmin.xlane.f32.xlu0 %v714
    %v716 = vpop.xlane.xlu0 %715
    %vm717 = vcmp.eq.f32.partialorder %v714, %v716
    %v718 = vsel %vm717, %v713, inf
    %719 = vmin.xlane.f32.xlu0 %v718
    %v720 = vpop.xlane.xlu0 %719
    %v721 = vcvt.f32.s32 %v720
    %v722 = vcvt.f32.s32 %v716
    %v723 = vshll.u32 %v722, 16
    %v724 = vadd.s32 %v723, %v721
    %vm725 = vcmp.gt.f32.partialorder %v663, 0.5
    %v726 = vsel %vm725, 0, %v724
    %vm727 = vcmp.eq.s32.totalorder %v56, 4
    %v728 = vsel %vm727, %v726, %v610
    %vm729 = vcmp.eq.s32.totalorder %v56, %v726
    %v730 = vsel %vm729, 1, 0
    %v731 = vcvt.s32.f32 %v730
    %v732 = vpack.c.bf16 %v731, %v731
    %733 = vmatprep.subr.bf16.mxu0 0
    %734 = vmatpush1.bf16.msra.mxu0 %v252
    %735 = vmatprep.subr.bf16.mxu0 0
    %736 = vmatpush1.bf16.msra.mxu0 %v251
    %737 = vmatprep.subr.bf16.mxu0 0
    %738 = vmatpush1.bf16.msra.mxu0 %v250
    %739 = vmatprep.subr.bf16.mxu0 0
    %740 = vmatpush1.bf16.msra.mxu0 %v249
    %741 = vmatprep.subr.bf16.mxu0 0
    %742 = vmatpush1.bf16.msra.mxu0 %v248
    %743 = vmatprep.subr.bf16.mxu0 0
    %744 = vmatpush1.bf16.msra.mxu0 %v247
    %745 = vmatprep.subr.bf16.mxu0 0
    %746 = vmatpush1.bf16.msra.mxu0 %v246
    %747 = vmatprep.subr.bf16.mxu0 0
    %748 = vmatpush1.bf16.msra.mxu0 %v245
    %749 = vmatprep.subr.bf16.mxu0 0
    %750 = vmatpush2.bf16.msra.mxu0 0
    %751 = vmatprep.subr.bf16.mxu0 0
    %752 = vmatpush2.bf16.msra.mxu0 0
    %753 = vmatprep.subr.bf16.mxu0 0
    %754 = vmatpush2.bf16.msra.mxu0 0
    %755 = vmatprep.subr.bf16.mxu0 0
    %756 = vmatpush2.bf16.msra.mxu0 0
    %757 = vmatprep.subr.bf16.mxu0 0
    %758 = vmatpush2.bf16.msra.mxu0 0
    %759 = vmatprep.subr.bf16.mxu0 0
    %760 = vmatpush2.bf16.msra.mxu0 0
    %761 = vmatprep.subr.bf16.mxu0 0
    %762 = vmatpush2.bf16.msra.mxu0 0
    %763 = vmatprep.subr.bf16.mxu0 0
    %764 = vmatpush2.bf16.msra.mxu0 0
    %765 = vmatprep.mubr.bf16.mxu0 0
    %766 = vmatmul.mubr.bf16.gmra.mxu0 %v732
    %v767 = vpop.f32.mrf.mxu0
    %v768 = vadd.f32 0.0, %v767
    %v769 = vpop.f32.mrf.mxu0
    %v770 = vpop.f32.mrf.mxu0
    %v771 = vpop.f32.mrf.mxu0
    %772 = vdwg.mxu0
    %v773 = vadd.f32 %v702, %v768
    %v774 = vtanh.pop %v773
    %v775 = vsel %vm725, 1, 0
    %vm776 = vcmp.eq.s32.totalorder %v775, 1
    %v777 = vsel %vm776, %v659, %v774
    %vm778 = vcmp.eq.s32.totalorder %v726, 0
    %v779 = vsel %vm778, 1, 0
    %v780 = vcvt.s32.f32 %v779
    %v781 = vmax.f32 %v663, %v780
    %v782 = vpack.c.bf16 %v777, %v777
    %783 = vmatprep.subr.bf16.mxu0 %v122
    %784 = vmatpush1.bf16.msra.mxu0 %v121
    %785 = vmatprep.subr.bf16.mxu0 %v120
    %786 = vmatpush1.bf16.msra.mxu0 %v119
    %787 = vmatprep.subr.bf16.mxu0 %v118
    %788 = vmatpush1.bf16.msra.mxu0 %v117
    %789 = vmatprep.subr.bf16.mxu0 %v116
    %790 = vmatpush1.bf16.msra.mxu0 %v115
    %791 = vmatprep.subr.bf16.mxu0 %v114
    %792 = vmatpush1.bf16.msra.mxu0 %v113
    %793 = vmatprep.subr.bf16.mxu0 %v112
    %794 = vmatpush1.bf16.msra.mxu0 %v111
    %795 = vmatprep.subr.bf16.mxu0 %v110
    %796 = vmatpush1.bf16.msra.mxu0 %v109
    %797 = vmatprep.subr.bf16.mxu0 %v108
    %798 = vmatpush1.bf16.msra.mxu0 %v107
    %799 = vmatprep.subr.bf16.mxu0 0
    %800 = vmatpush2.bf16.msra.mxu0 0
    %801 = vmatprep.subr.bf16.mxu0 0
    %802 = vmatpush2.bf16.msra.mxu0 0
    %803 = vmatprep.subr.bf16.mxu0 0
    %804 = vmatpush2.bf16.msra.mxu0 0
    %805 = vmatprep.subr.bf16.mxu0 0
    %806 = vmatpush2.bf16.msra.mxu0 0
    %807 = vmatprep.subr.bf16.mxu0 0
    %808 = vmatpush2.bf16.msra.mxu0 0
    %809 = vmatprep.subr.bf16.mxu0 0
    %810 = vmatpush2.bf16.msra.mxu0 0
    %811 = vmatprep.subr.bf16.mxu0 0
    %812 = vmatpush2.bf16.msra.mxu0 0
    %813 = vmatprep.subr.bf16.mxu0 0
    %814 = vmatpush2.bf16.msra.mxu0 0
    %815 = vmatprep.mubr.bf16.mxu0 0
    %816 = vmatmul.mubr.bf16.gmra.mxu0 %v782
    %v817 = vpop.f32.mrf.mxu0
    %v818 = vadd.f32 0.0, %v817
    %v819 = vpop.f32.mrf.mxu0
    %v820 = vadd.f32 0.0, %v819
    %v821 = vpop.f32.mrf.mxu0
    %v822 = vpop.f32.mrf.mxu0
    %823 = vdwg.mxu0
    %v824 = vadd.f32 %v818, %v184
    %825 = vmax.xlane.f32.xlu0 %v824
    %v826 = vpop.xlane.xlu0 %825
    %vm827 = vcmp.eq.f32.partialorder %v824, %v826
    %v828 = vsel %vm827, %v56, 128
    %v829 = vand.u32 %v828, 65535
    %v830 = vshra.s32 %v828, 16
    %v831 = vcvt.s32.f32 %v829
    %v832 = vcvt.s32.f32 %v830
    %833 = vmin.xlane.f32.xlu0 %v832
    %v834 = vpop.xlane.xlu0 %833
    %vm835 = vcmp.eq.f32.partialorder %v832, %v834
    %v836 = vsel %vm835, %v831, inf
    %837 = vmin.xlane.f32.xlu0 %v836
    %v838 = vpop.xlane.xlu0 %837
    %v839 = vcvt.f32.s32 %v838
    %v840 = vcvt.f32.s32 %v834
    %v841 = vshll.u32 %v840, 16
    %v842 = vadd.s32 %v841, %v839
    %vm843 = vcmp.gt.f32.partialorder %v781, 0.5
    %v844 = vsel %vm843, 0, %v842
    %vm845 = vcmp.eq.s32.totalorder %v56, 5
    %v846 = vsel %vm845, %v844, %v728
    %vm847 = vcmp.eq.s32.totalorder %v56, %v844
    %v848 = vsel %vm847, 1, 0
    %v849 = vcvt.s32.f32 %v848
    %v850 = vpack.c.bf16 %v849, %v849
    %851 = vmatprep.subr.bf16.mxu0 0
    %852 = vmatpush1.bf16.msra.mxu0 %v252
    %853 = vmatprep.subr.bf16.mxu0 0
    %854 = vmatpush1.bf16.msra.mxu0 %v251
    %855 = vmatprep.subr.bf16.mxu0 0
    %856 = vmatpush1.bf16.msra.mxu0 %v250
    %857 = vmatprep.subr.bf16.mxu0 0
    %858 = vmatpush1.bf16.msra.mxu0 %v249
    %859 = vmatprep.subr.bf16.mxu0 0
    %860 = vmatpush1.bf16.msra.mxu0 %v248
    %861 = vmatprep.subr.bf16.mxu0 0
    %862 = vmatpush1.bf16.msra.mxu0 %v247
    %863 = vmatprep.subr.bf16.mxu0 0
    %864 = vmatpush1.bf16.msra.mxu0 %v246
    %865 = vmatprep.subr.bf16.mxu0 0
    %866 = vmatpush1.bf16.msra.mxu0 %v245
    %867 = vmatprep.subr.bf16.mxu0 0
    %868 = vmatpush2.bf16.msra.mxu0 0
    %869 = vmatprep.subr.bf16.mxu0 0
    %870 = vmatpush2.bf16.msra.mxu0 0
    %871 = vmatprep.subr.bf16.mxu0 0
    %872 = vmatpush2.bf16.msra.mxu0 0
    %873 = vmatprep.subr.bf16.mxu0 0
    %874 = vmatpush2.bf16.msra.mxu0 0
    %875 = vmatprep.subr.bf16.mxu0 0
    %876 = vmatpush2.bf16.msra.mxu0 0
    %877 = vmatprep.subr.bf16.mxu0 0
    %878 = vmatpush2.bf16.msra.mxu0 0
    %879 = vmatprep.subr.bf16.mxu0 0
    %880 = vmatpush2.bf16.msra.mxu0 0
    %881 = vmatprep.subr.bf16.mxu0 0
    %882 = vmatpush2.bf16.msra.mxu0 0
    %883 = vmatprep.mubr.bf16.mxu0 0
    %884 = vmatmul.mubr.bf16.gmra.mxu0 %v850
    %v885 = vpop.f32.mrf.mxu0
    %v886 = vadd.f32 0.0, %v885
    %v887 = vpop.f32.mrf.mxu0
    %v888 = vpop.f32.mrf.mxu0
    %v889 = vpop.f32.mrf.mxu0
    %890 = vdwg.mxu0
    %v891 = vadd.f32 %v820, %v886
    %v892 = vtanh.pop %v891
    %v893 = vsel %vm843, 1, 0
    %vm894 = vcmp.eq.s32.totalorder %v893, 1
    %v895 = vsel %vm894, %v777, %v892
    %vm896 = vcmp.eq.s32.totalorder %v844, 0
    %v897 = vsel %vm896, 1, 0
    %v898 = vcvt.s32.f32 %v897
    %v899 = vmax.f32 %v781, %v898
    %v900 = vpack.c.bf16 %v895, %v895
    %901 = vmatprep.subr.bf16.mxu0 %v122
    %902 = vmatpush1.bf16.msra.mxu0 %v121
    %903 = vmatprep.subr.bf16.mxu0 %v120
    %904 = vmatpush1.bf16.msra.mxu0 %v119
    %905 = vmatprep.subr.bf16.mxu0 %v118
    %906 = vmatpush1.bf16.msra.mxu0 %v117
    %907 = vmatprep.subr.bf16.mxu0 %v116
    %908 = vmatpush1.bf16.msra.mxu0 %v115
    %909 = vmatprep.subr.bf16.mxu0 %v114
    %910 = vmatpush1.bf16.msra.mxu0 %v113
    %911 = vmatprep.subr.bf16.mxu0 %v112
    %912 = vmatpush1.bf16.msra.mxu0 %v111
    %913 = vmatprep.subr.bf16.mxu0 %v110
    %914 = vmatpush1.bf16.msra.mxu0 %v109
    %915 = vmatprep.subr.bf16.mxu0 %v108
    %916 = vmatpush1.bf16.msra.mxu0 %v107
    %917 = vmatprep.subr.bf16.mxu0 0
    %918 = vmatpush2.bf16.msra.mxu0 0
    %919 = vmatprep.subr.bf16.mxu0 0
    %920 = vmatpush2.bf16.msra.mxu0 0
    %921 = vmatprep.subr.bf16.mxu0 0
    %922 = vmatpush2.bf16.msra.mxu0 0
    %923 = vmatprep.subr.bf16.mxu0 0
    %924 = vmatpush2.bf16.msra.mxu0 0
    %925 = vmatprep.subr.bf16.mxu0 0
    %926 = vmatpush2.bf16.msra.mxu0 0
    %927 = vmatprep.subr.bf16.mxu0 0
    %928 = vmatpush2.bf16.msra.mxu0 0
    %929 = vmatprep.subr.bf16.mxu0 0
    %930 = vmatpush2.bf16.msra.mxu0 0
    %931 = vmatprep.subr.bf16.mxu0 0
    %932 = vmatpush2.bf16.msra.mxu0 0
    %933 = vmatprep.mubr.bf16.mxu0 0
    %934 = vmatmul.mubr.bf16.gmra.mxu0 %v900
    %v935 = vpop.f32.mrf.mxu0
    %v936 = vadd.f32 0.0, %v935
    %v937 = vpop.f32.mrf.mxu0
    %v938 = vadd.f32 0.0, %v937
    %v939 = vpop.f32.mrf.mxu0
    %v940 = vpop.f32.mrf.mxu0
    %941 = vdwg.mxu0
    %v942 = vadd.f32 %v936, %v184
    %943 = vmax.xlane.f32.xlu0 %v942
    %v944 = vpop.xlane.xlu0 %943
    %vm945 = vcmp.eq.f32.partialorder %v942, %v944
    %v946 = vsel %vm945, %v56, 128
    %v947 = vand.u32 %v946, 65535
    %v948 = vshra.s32 %v946, 16
    %v949 = vcvt.s32.f32 %v947
    %v950 = vcvt.s32.f32 %v948
    %951 = vmin.xlane.f32.xlu0 %v950
    %v952 = vpop.xlane.xlu0 %951
    %vm953 = vcmp.eq.f32.partialorder %v950, %v952
    %v954 = vsel %vm953, %v949, inf
    %955 = vmin.xlane.f32.xlu0 %v954
    %v956 = vpop.xlane.xlu0 %955
    %v957 = vcvt.f32.s32 %v956
    %v958 = vcvt.f32.s32 %v952
    %v959 = vshll.u32 %v958, 16
    %v960 = vadd.s32 %v959, %v957
    %vm961 = vcmp.gt.f32.partialorder %v899, 0.5
    %v962 = vsel %vm961, 0, %v960
    %vm963 = vcmp.eq.s32.totalorder %v56, 6
    %v964 = vsel %vm963, %v962, %v846
    %vm965 = vcmp.eq.s32.totalorder %v56, %v962
    %v966 = vsel %vm965, 1, 0
    %v967 = vcvt.s32.f32 %v966
    %v968 = vpack.c.bf16 %v967, %v967
    %969 = vmatprep.subr.bf16.mxu0 0
    %970 = vmatpush1.bf16.msra.mxu0 %v252
    %971 = vmatprep.subr.bf16.mxu0 0
    %972 = vmatpush1.bf16.msra.mxu0 %v251
    %973 = vmatprep.subr.bf16.mxu0 0
    %974 = vmatpush1.bf16.msra.mxu0 %v250
    %975 = vmatprep.subr.bf16.mxu0 0
    %976 = vmatpush1.bf16.msra.mxu0 %v249
    %977 = vmatprep.subr.bf16.mxu0 0
    %978 = vmatpush1.bf16.msra.mxu0 %v248
    %979 = vmatprep.subr.bf16.mxu0 0
    %980 = vmatpush1.bf16.msra.mxu0 %v247
    %981 = vmatprep.subr.bf16.mxu0 0
    %982 = vmatpush1.bf16.msra.mxu0 %v246
    %983 = vmatprep.subr.bf16.mxu0 0
    %984 = vmatpush1.bf16.msra.mxu0 %v245
    %985 = vmatprep.subr.bf16.mxu0 0
    %986 = vmatpush2.bf16.msra.mxu0 0
    %987 = vmatprep.subr.bf16.mxu0 0
    %988 = vmatpush2.bf16.msra.mxu0 0
    %989 = vmatprep.subr.bf16.mxu0 0
    %990 = vmatpush2.bf16.msra.mxu0 0
    %991 = vmatprep.subr.bf16.mxu0 0
    %992 = vmatpush2.bf16.msra.mxu0 0
    %993 = vmatprep.subr.bf16.mxu0 0
    %994 = vmatpush2.bf16.msra.mxu0 0
    %995 = vmatprep.subr.bf16.mxu0 0
    %996 = vmatpush2.bf16.msra.mxu0 0
    %997 = vmatprep.subr.bf16.mxu0 0
    %998 = vmatpush2.bf16.msra.mxu0 0
    %999 = vmatprep.subr.bf16.mxu0 0
    %1000 = vmatpush2.bf16.msra.mxu0 0
    %1001 = vmatprep.mubr.bf16.mxu0 0
    %1002 = vmatmul.mubr.bf16.gmra.mxu0 %v968
    %v1003 = vpop.f32.mrf.mxu0
    %v1004 = vadd.f32 0.0, %v1003
    %v1005 = vpop.f32.mrf.mxu0
    %v1006 = vpop.f32.mrf.mxu0
    %v1007 = vpop.f32.mrf.mxu0
    %1008 = vdwg.mxu0
    %v1009 = vadd.f32 %v938, %v1004
    %v1010 = vtanh.pop %v1009
    %v1011 = vsel %vm961, 1, 0
    %vm1012 = vcmp.eq.s32.totalorder %v1011, 1
    %v1013 = vsel %vm1012, %v895, %v1010
    %vm1014 = vcmp.eq.s32.totalorder %v962, 0
    %v1015 = vsel %vm1014, 1, 0
    %v1016 = vcvt.s32.f32 %v1015
    %v1017 = vmax.f32 %v899, %v1016
    %v1018 = vpack.c.bf16 %v1013, %v1013
    %1019 = vmatprep.subr.bf16.mxu0 %v122
    %1020 = vmatpush1.bf16.msra.mxu0 %v121
    %1021 = vmatprep.subr.bf16.mxu0 %v120
    %1022 = vmatpush1.bf16.msra.mxu0 %v119
    %1023 = vmatprep.subr.bf16.mxu0 %v118
    %1024 = vmatpush1.bf16.msra.mxu0 %v117
    %1025 = vmatprep.subr.bf16.mxu0 %v116
    %1026 = vmatpush1.bf16.msra.mxu0 %v115
    %1027 = vmatprep.subr.bf16.mxu0 %v114
    %1028 = vmatpush1.bf16.msra.mxu0 %v113
    %1029 = vmatprep.subr.bf16.mxu0 %v112
    %1030 = vmatpush1.bf16.msra.mxu0 %v111
    %1031 = vmatprep.subr.bf16.mxu0 %v110
    %1032 = vmatpush1.bf16.msra.mxu0 %v109
    %1033 = vmatprep.subr.bf16.mxu0 %v108
    %1034 = vmatpush1.bf16.msra.mxu0 %v107
    %1035 = vmatprep.subr.bf16.mxu0 0
    %1036 = vmatpush2.bf16.msra.mxu0 0
    %1037 = vmatprep.subr.bf16.mxu0 0
    %1038 = vmatpush2.bf16.msra.mxu0 0
    %1039 = vmatprep.subr.bf16.mxu0 0
    %1040 = vmatpush2.bf16.msra.mxu0 0
    %1041 = vmatprep.subr.bf16.mxu0 0
    %1042 = vmatpush2.bf16.msra.mxu0 0
    %1043 = vmatprep.subr.bf16.mxu0 0
    %1044 = vmatpush2.bf16.msra.mxu0 0
    %1045 = vmatprep.subr.bf16.mxu0 0
    %1046 = vmatpush2.bf16.msra.mxu0 0
    %1047 = vmatprep.subr.bf16.mxu0 0
    %1048 = vmatpush2.bf16.msra.mxu0 0
    %1049 = vmatprep.subr.bf16.mxu0 0
    %1050 = vmatpush2.bf16.msra.mxu0 0
    %1051 = vmatprep.mubr.bf16.mxu0 0
    %1052 = vmatmul.mubr.bf16.gmra.mxu0 %v1018
    %v1053 = vpop.f32.mrf.mxu0
    %v1054 = vadd.f32 0.0, %v1053
    %v1055 = vpop.f32.mrf.mxu0
    %v1056 = vadd.f32 0.0, %v1055
    %v1057 = vpop.f32.mrf.mxu0
    %v1058 = vpop.f32.mrf.mxu0
    %1059 = vdwg.mxu0
    %v1060 = vadd.f32 %v1054, %v184
    %1061 = vmax.xlane.f32.xlu0 %v1060
    %v1062 = vpop.xlane.xlu0 %1061
    %vm1063 = vcmp.eq.f32.partialorder %v1060, %v1062
    %v1064 = vsel %vm1063, %v56, 128
    %v1065 = vand.u32 %v1064, 65535
    %v1066 = vshra.s32 %v1064, 16
    %v1067 = vcvt.s32.f32 %v1065
    %v1068 = vcvt.s32.f32 %v1066
    %1069 = vmin.xlane.f32.xlu0 %v1068
    %v1070 = vpop.xlane.xlu0 %1069
    %vm1071 = vcmp.eq.f32.partialorder %v1068, %v1070
    %v1072 = vsel %vm1071, %v1067, inf
    %1073 = vmin.xlane.f32.xlu0 %v1072
    %v1074 = vpop.xlane.xlu0 %1073
    %v1075 = vcvt.f32.s32 %v1074
    %v1076 = vcvt.f32.s32 %v1070
    %v1077 = vshll.u32 %v1076, 16
    %v1078 = vadd.s32 %v1077, %v1075
    %vm1079 = vcmp.gt.f32.partialorder %v1017, 0.5
    %v1080 = vsel %vm1079, 0, %v1078
    %vm1081 = vcmp.eq.s32.totalorder %v56, 7
    %v1082 = vsel %vm1081, %v1080, %v964
    %vm1083 = vcmp.eq.s32.totalorder %v56, %v1080
    %v1084 = vsel %vm1083, 1, 0
    %v1085 = vcvt.s32.f32 %v1084
    %v1086 = vpack.c.bf16 %v1085, %v1085
    %1087 = vmatprep.subr.bf16.mxu0 0
    %1088 = vmatpush1.bf16.msra.mxu0 %v252
    %1089 = vmatprep.subr.bf16.mxu0 0
    %1090 = vmatpush1.bf16.msra.mxu0 %v251
    %1091 = vmatprep.subr.bf16.mxu0 0
    %1092 = vmatpush1.bf16.msra.mxu0 %v250
    %1093 = vmatprep.subr.bf16.mxu0 0
    %1094 = vmatpush1.bf16.msra.mxu0 %v249
    %1095 = vmatprep.subr.bf16.mxu0 0
    %1096 = vmatpush1.bf16.msra.mxu0 %v248
    %1097 = vmatprep.subr.bf16.mxu0 0
    %1098 = vmatpush1.bf16.msra.mxu0 %v247
    %1099 = vmatprep.subr.bf16.mxu0 0
    %1100 = vmatpush1.bf16.msra.mxu0 %v246
    %1101 = vmatprep.subr.bf16.mxu0 0
    %1102 = vmatpush1.bf16.msra.mxu0 %v245
    %1103 = vmatprep.subr.bf16.mxu0 0
    %1104 = vmatpush2.bf16.msra.mxu0 0
    %1105 = vmatprep.subr.bf16.mxu0 0
    %1106 = vmatpush2.bf16.msra.mxu0 0
    %1107 = vmatprep.subr.bf16.mxu0 0
    %1108 = vmatpush2.bf16.msra.mxu0 0
    %1109 = vmatprep.subr.bf16.mxu0 0
    %1110 = vmatpush2.bf16.msra.mxu0 0
    %1111 = vmatprep.subr.bf16.mxu0 0
    %1112 = vmatpush2.bf16.msra.mxu0 0
    %1113 = vmatprep.subr.bf16.mxu0 0
    %1114 = vmatpush2.bf16.msra.mxu0 0
    %1115 = vmatprep.subr.bf16.mxu0 0
    %1116 = vmatpush2.bf16.msra.mxu0 0
    %1117 = vmatprep.subr.bf16.mxu0 0
    %1118 = vmatpush2.bf16.msra.mxu0 0
    %1119 = vmatprep.mubr.bf16.mxu0 0
    %1120 = vmatmul.mubr.bf16.gmra.mxu0 %v1086
    %v1121 = vpop.f32.mrf.mxu0
    %v1122 = vadd.f32 0.0, %v1121
    %v1123 = vpop.f32.mrf.mxu0
    %v1124 = vpop.f32.mrf.mxu0
    %v1125 = vpop.f32.mrf.mxu0
    %1126 = vdwg.mxu0
    %v1127 = vadd.f32 %v1056, %v1122
    %v1128 = vtanh.pop %v1127
    %v1129 = vsel %vm1079, 1, 0
    %vm1130 = vcmp.eq.s32.totalorder %v1129, 1
    %v1131 = vsel %vm1130, %v1013, %v1128
    %1132 = vst [vmem:[#allocation2] sm:$0xff] %v1082
    %1133 = vst [vmem:[#allocation4] sm:$0xff] %v1131
    // Predicated region
    $region18: #{greedy_decode.1} parent=1 // pred_check
      _
    $region19: #{greedy_decode.1} parent=1 // pred_check_branch
      %1135 = sbr.rel (0) target = $region21
    $region20: #{greedy_decode.1} parent=1 // pred_region
      %s1137 = ssub.s32 128, 128
      %1138 = vsyncadd [#allocation3], %s1137
      %s1140 = sshll.u32 [#allocation2], 4
      %s1141 = int_to_ptr.vmem [resolvable:$true] %s1140
      %1143 = dma.vmem_to_hbm [thread:$0]  %s1141, 128, %s4, [#allocation3]
    $region21: #{greedy_decode.1} parent=1 // pred_fallthru
      _
    // Predicated region
    $region22: #{greedy_decode.1} parent=1 // pred_check
      _
    $region23: #{greedy_decode.1} parent=1 // pred_check_branch
      %1145 = sbr.rel (0) target = $region25
    $region24: #{greedy_decode.1} parent=1 // pred_region
      %s1147 = ssub.s32 128, 128
      %1148 = vsyncadd [#allocation5], %s1147
      %s1150 = sshll.u32 [#allocation4], 4
      %s1151 = int_to_ptr.vmem [resolvable:$true] %s1150
      %1153 = dma.vmem_to_hbm [thread:$0]  %s1151, 128, %s5, [#allocation5]
    $region25: #{greedy_decode.1} parent=1 // pred_fallthru
      _
    // Predicated region
    $region26: #{greedy_decode.1} parent=1 // pred_check
      _
    $region27: #{greedy_decode.1} parent=1 // pred_check_branch
      %1155 = sbr.rel (0) target = $region29
    $region28: #{greedy_decode.1} parent=1 // pred_region
      %1156 = dma.done [#allocation3], 128
    $region29: #{greedy_decode.1} parent=1 // pred_fallthru
      _
    // Predicated region
    $region30: #{greedy_decode.1} parent=1 // pred_check
      _
    $region31: #{greedy_decode.1} parent=1 // pred_check_branch
      %1158 = sbr.rel (0) target = $region33
    $region32: #{greedy_decode.1} parent=1 // pred_region
      %1159 = dma.done [#allocation5], 128
    $region33: #{greedy_decode.1} parent=1 // pred_fallthru
      _
    %1160 = vsyncpa [#allocation3], 1
    %1161 = vsyncpa [#allocation5], 1

</llo_original>
